<compile_context>
chip_gen: v7x
topology: tpu7x:2x2x1
jax: 0.10.0
libtpu: 0.0.40
codegen_flags: <defaults>
</compile_context>

<pallas_src>
import functools

import jax
import jax.numpy as jnp
from jax.experimental import pallas as pl
from jax.experimental.pallas import tpu as pltpu

_LANE = 128
_SUBLANE = 8
_BN_EPS = 1e-5
_FUSE_WEIGHT_BYTES = 4 * 1024 * 1024        # above this, fall back to tiled matmul path
_DECONV_TAPS = ((0, 0), (0, 1), (1, 0), (1, 1))


def _round_up(x, m):
    return ((x + m - 1) // m) * m


# ----------------------------------------------------------------------------
# Fused matmul (optional prologue / scale / shift / relu / cosine epilogue)
# ----------------------------------------------------------------------------
def _matmul_kernel(*refs, nk, act, prologue, has_scale, has_shift, add_cosine):
    i = 0
    a_ref = refs[i]; i += 1
    aux_ref = None
    if prologue is not None:
        aux_ref = refs[i]; i += 1
    b_ref = refs[i]; i += 1
    s_ref = None
    t_ref = None
    if has_scale:
        s_ref = refs[i]; i += 1
    if has_shift:
        t_ref = refs[i]; i += 1
    o_ref = refs[i]; i += 1
    acc_ref = refs[i] if nk > 1 else None

    a1 = a2 = None
    if prologue == "muldiff":                     # x1 * (x2 - x1)
        a1 = a_ref[...].astype(jnp.float32)
        a2 = aux_ref[...].astype(jnp.float32)
        a_in = (a1 * (a2 - a1)).astype(jnp.bfloat16)
    elif prologue == "diff":                      # x2 - x1
        a1 = a_ref[...].astype(jnp.float32)
        a2 = aux_ref[...].astype(jnp.float32)
        a_in = (a2 - a1).astype(jnp.bfloat16)
    else:
        a_in = a_ref[...].astype(jnp.bfloat16)
    b_in = b_ref[...].astype(jnp.bfloat16)

    def epilogue(acc):
        y = acc
        if has_scale:
            y = y * s_ref[...]
        if has_shift:
            y = y + t_ref[...]
        if act == "relu":
            y = jnp.maximum(y, 0.0)
        if add_cosine:                            # + CosineSimilarity(x1, x2) per row
            num = jnp.sum(a1 * a2, axis=-1, keepdims=True)
            na = jnp.sqrt(jnp.sum(a1 * a1, axis=-1, keepdims=True))
            nb = jnp.sqrt(jnp.sum(a2 * a2, axis=-1, keepdims=True))
            y = y + num / (jnp.maximum(na, 1e-8) * jnp.maximum(nb, 1e-8))
        o_ref[...] = y.astype(o_ref.dtype)

    if nk == 1:
        epilogue(jnp.dot(a_in, b_in, preferred_element_type=jnp.float32))
    else:
        @pl.when(pl.program_id(2) == 0)
        def _():
            acc_ref[...] = jnp.zeros_like(acc_ref)

        acc_ref[...] += jnp.dot(a_in, b_in, preferred_element_type=jnp.float32)

        @pl.when(pl.program_id(2) == nk - 1)
        def _():
            epilogue(acc_ref[...])


def pallas_matmul(a, b, scale=None, shift=None, act="none", out_dtype=jnp.float32,
                  a_aux=None, prologue=None, add_cosine=False):
    """(M,K)@(K,N) on the MXU (bf16 operands, f32 accum) with a fused epilogue
    y = acc[*scale][+shift][,relu][,+cos(a, aux)] and an optional fused prologue on A."""
    M, K = a.shape
    K2, N = b.shape
    assert K == K2
    has_scale = scale is not None
    has_shift = shift is not None
    if prologue is not None:
        assert a_aux is not None and a_aux.shape == a.shape
    if add_cosine:
        assert prologue is not None

    # --- tiles: no K padding/tiling for the (common) K<=4096 case -----------
    if M <= 256:
        tm = _round_up(M, 16) if M >= 16 else _round_up(M, _SUBLANE)
    else:
        tm = 256
    Mp = _round_up(M, tm)

    Np0 = _round_up(N, _LANE)
    if Np0 <= 512:
        tn = Np0
    else:
        tn = next(c for c in (512, 256, 128) if Np0 % c == 0)
    Np = _round_up(N, tn)

    if K <= 4096:
        tk, Kp, nk = K, K, 1
    else:
        tk = 512
        Kp = _round_up(K, tk)
        nk = Kp // tk
    assert not (add_cosine and nk > 1)

    pads_a = ((0, Mp - M), (0, Kp - K))
    if pads_a != ((0, 0), (0, 0)):
        a = jnp.pad(a, pads_a)
        if a_aux is not None:
            a_aux = jnp.pad(a_aux, pads_a)
    if (Kp - K, Np - N) != (0, 0):
        b = jnp.pad(b, ((0, Kp - K), (0, Np - N)))

    args = [a]
    in_specs = [pl.BlockSpec((tm, tk), lambda i, j, k: (i, k))]
    if prologue is not None:
        args.append(a_aux)
        in_specs.append(pl.BlockSpec((tm, tk), lambda i, j, k: (i, k)))
    args.append(b)
    in_specs.append(pl.BlockSpec((tk, tn), lambda i, j, k: (k, j)))
    if has_scale:
        s = scale.astype(jnp.float32)
        if Np != N:
            s = jnp.pad(s, (0, Np - N))
        args.append(s.reshape(1, Np))
        in_specs.append(pl.BlockSpec((1, tn), lambda i, j, k: (0, j)))
    if has_shift:
        t = shift.astype(jnp.float32)
        if Np != N:
            t = jnp.pad(t, (0, Np - N))
        args.append(t.reshape(1, Np))
        in_specs.append(pl.BlockSpec((1, tn), lambda i, j, k: (0, j)))

    kernel = functools.partial(_matmul_kernel, nk=nk, act=act, prologue=prologue,
                               has_scale=has_scale, has_shift=has_shift,
                               add_cosine=add_cosine)
    out = pl.pallas_call(
        kernel,
        out_shape=jax.ShapeDtypeStruct((Mp, Np), out_dtype),
        grid_spec=pltpu.PrefetchScalarGridSpec(
            num_scalar_prefetch=0,
            grid=(Mp // tm, Np // tn, nk),
            in_specs=in_specs,
            out_specs=pl.BlockSpec((tm, tn), lambda i, j, k: (i, j)),
            scratch_shapes=([pltpu.VMEM((tm, tn), jnp.float32)] if nk > 1 else [])),
        compiler_params=pltpu.CompilerParams(
            dimension_semantics=("parallel", "parallel", "arbitrary")),
    )(*args)
    if (Mp, Np) != (M, N):
        out = out[:M, :N]
    return out


# ----------------------------------------------------------------------------
# Multi-head attention: one masked score matmul per batch, lane-dense output
# ----------------------------------------------------------------------------
def _attn_kernel(q_ref, kv_ref, o_ref, *, heads, scale):
    L, A = q_ref.shape
    d = A // heads
    LH = L * heads
    q = q_ref[...].astype(jnp.bfloat16).reshape(LH, d)      # rows ordered (token, head)
    kv = kv_ref[...].astype(jnp.bfloat16)
    k = kv[:, :A].reshape(LH, d)
    v = kv[:, A:].reshape(LH, d)
    dots = jax.lax.dot_general(q, k, (((1,), (1,)), ((), ())),
                               preferred_element_type=jnp.float32) * scale
    r = jax.lax.broadcasted_iota(jnp.int32, (LH, LH), 0)
    c = jax.lax.broadcasted_iota(jnp.int32, (LH, LH), 1)
    dots = jnp.where((r % heads) == (c % heads), dots, -1e30)   # head block-diagonal mask
    dots = dots - jnp.max(dots, axis=-1, keepdims=True)
    p = jnp.exp(dots)
    attn = p * pl.reciprocal(jnp.sum(p, axis=-1, keepdims=True), approx=True)
    out = jnp.dot(attn.astype(jnp.bfloat16), v, preferred_element_type=jnp.float32)
    o_ref[...] = out.reshape(L, A).astype(o_ref.dtype)       # merged heads, lane dense


def pallas_attention(q, kv, heads):
    """q: (B, L, heads*d); kv: (B, L, 2*heads*d)  ->  (B, L, heads*d) bf16."""
    B, L, A = q.shape
    d = A // heads
    kernel = functools.partial(_attn_kernel, heads=heads, scale=d ** -0.5)
    return pl.pallas_call(
        kernel,
        out_shape=jax.ShapeDtypeStruct((B, L, A), jnp.bfloat16),
        grid=(B,),
        in_specs=[pl.BlockSpec((None, L, A), lambda b: (b, 0, 0)),
                  pl.BlockSpec((None, L, 2 * A), lambda b: (b, 0, 0))],
        out_specs=pl.BlockSpec((None, L, A), lambda b: (b, 0, 0)),
        compiler_params=pltpu.CompilerParams(dimension_semantics=("parallel",)),
    )(q, kv)


# ----------------------------------------------------------------------------
# LayerNorm(x + res) with optional fused post-residual add
# ----------------------------------------------------------------------------
def _ln_kernel(*refs, eps, has_post):
    if has_post:
        x_ref, r_ref, g_ref, b_ref, p_ref, o_ref = refs
    else:
        x_ref, r_ref, g_ref, b_ref, o_ref = refs
    x = x_ref[...].astype(jnp.float32) + r_ref[...].astype(jnp.float32)
    mu = jnp.mean(x, axis=-1, keepdims=True)
    xc = x - mu
    var = jnp.mean(xc * xc, axis=-1, keepdims=True)
    y = xc * jax.lax.rsqrt(var + eps) * g_ref[...] + b_ref[...]
    if has_post:
        y = y + p_ref[...].astype(jnp.float32)
    o_ref[...] = y


def pallas_layernorm_add(x, res, gamma, beta, post=None, eps=1e-5):
    M, C = x.shape
    tm = min(256, _round_up(M, _SUBLANE))
    Mp = _round_up(M, tm)
    if Mp != M:
        pad = ((0, Mp - M), (0, 0))
        x = jnp.pad(x, pad)
        res = jnp.pad(res, pad)
        if post is not None:
            post = jnp.pad(post, pad)
    args = [x, res,
            gamma.astype(jnp.float32).reshape(1, C),
            beta.astype(jnp.float32).reshape(1, C)]
    in_specs = [pl.BlockSpec((tm, C), lambda i: (i, 0)),
                pl.BlockSpec((tm, C), lambda i: (i, 0)),
                pl.BlockSpec((1, C), lambda i: (0, 0)),
                pl.BlockSpec((1, C), lambda i: (0, 0))]
    if post is not None:
        args.append(post)
        in_specs.append(pl.BlockSpec((tm, C), lambda i: (i, 0)))
    kernel = functools.partial(_ln_kernel, eps=eps, has_post=post is not None)
    out = pl.pallas_call(
        kernel,
        out_shape=jax.ShapeDtypeStruct((Mp, C), jnp.float32),
        grid=(Mp // tm,),
        in_specs=in_specs,
        out_specs=pl.BlockSpec((tm, C), lambda i: (i, 0)),
        compiler_params=pltpu.CompilerParams(dimension_semantics=("parallel",)),
    )(*args)
    return out[:M] if Mp != M else out


# ----------------------------------------------------------------------------
# Dynamic_conv: three depthwise convs (+bias+BN) fused, gridded over batch
# ----------------------------------------------------------------------------
def _dynconv_kernel(x_ref, w3_ref, w15_ref, w51_ref, s_ref, t_ref, o_ref, *, H, W):
    xp = x_ref[...]                                 # (H+4, W+4, C) f32, pad=2
    C = xp.shape[-1]
    w3 = w3_ref[...]
    w15 = w15_ref[...]
    w51 = w51_ref[...]
    acc3 = jnp.zeros((H, W, C), jnp.float32)        # 3x3, pad 1
    for i in range(3):
        for j in range(3):
            acc3 = acc3 + xp[1 + i:1 + i + H, 1 + j:1 + j + W, :] * w3[i, j]
    acc15 = jnp.zeros((H, W, C), jnp.float32)       # 1x5, pad (0,2)
    for j in range(5):
        acc15 = acc15 + xp[2:2 + H, j:j + W, :] * w15[0, j]
    acc51 = jnp.zeros((H, W, C), jnp.float32)       # 5x1, pad (2,0)
    for i in range(5):
        acc51 = acc51 + xp[i:i + H, 2:2 + W, :] * w51[i, 0]
    o_ref[:, :, 0:C] = acc3 * s_ref[0] + t_ref[0]
    o_ref[:, :, C:2 * C] = acc15 * s_ref[1] + t_ref[1]
    o_ref[:, :, 2 * C:3 * C] = acc51 * s_ref[2] + t_ref[2]


def pallas_dynamic_conv(x, w3, w15, w51, scale3c, shift3c):
    B, H, W, C = x.shape
    xp = jnp.pad(x, ((0, 0), (2, 2), (2, 2), (0, 0)))
    kernel = functools.partial(_dynconv_kernel, H=H, W=W)
    return pl.pallas_call(
        kernel,
        out_shape=jax.ShapeDtypeStruct((B, H, W, 3 * C), jnp.float32),
        grid=(B,),
        in_specs=[pl.BlockSpec((None, H + 4, W + 4, C), lambda b: (b, 0, 0, 0)),
                  pl.BlockSpec((3, 3, C), lambda b: (0, 0, 0)),
                  pl.BlockSpec((1, 5, C), lambda b: (0, 0, 0)),
                  pl.BlockSpec((5, 1, C), lambda b: (0, 0, 0)),
                  pl.BlockSpec((3, C), lambda b: (0, 0)),
                  pl.BlockSpec((3, C), lambda b: (0, 0))],
        out_specs=pl.BlockSpec((None, H, W, 3 * C), lambda b: (b, 0, 0, 0)),
        compiler_params=pltpu.CompilerParams(dimension_semantics=("parallel",)),
    )(xp, w3, w15, w51, scale3c.reshape(3, C), shift3c.reshape(3, C))


# ----------------------------------------------------------------------------
# Dense 3x3 conv (+BN+ReLU): in-kernel im2col for the high-res levels
# ----------------------------------------------------------------------------
def _conv3x3_kernel(x_ref, w_ref, s_ref, t_ref, o_ref, *, H, W):
    xp = x_ref[...].astype(jnp.bfloat16)            # (H+2, W+2, Cin)
    Cin = xp.shape[-1]
    cols = jnp.concatenate(
        [xp[i:i + H, j:j + W, :] for i in range(3) for j in range(3)],
        axis=-1).reshape(H * W, 9 * Cin)
    acc = jnp.dot(cols, w_ref[...], preferred_element_type=jnp.float32)
    y = jnp.maximum(acc * s_ref[...] + t_ref[...], 0.0)
    o_ref[...] = y.reshape(H, W, -1).astype(o_ref.dtype)


def conv3x3_bn_relu(x, w_hwio, scale, shift, out_dtype=jnp.float32):
    B, H, W, Cin = x.shape
    Cout = w_hwio.shape[-1]
    w2d = w_hwio.reshape(9 * Cin, Cout)
    xp = jnp.pad(x, ((0, 0), (1, 1), (1, 1), (0, 0)))
    if 9 * Cin * Cout * w2d.dtype.itemsize > _FUSE_WEIGHT_BYTES or W % _SUBLANE != 0:
        # channel-heavy, spatially tiny levels: HBM im2col + tiled matmul
        cols = jnp.concatenate(
            [xp[:, i:i + H, j:j + W, :] for i in range(3) for j in range(3)], axis=-1)
        out = pallas_matmul(cols.reshape(B * H * W, 9 * Cin), w2d,
                            scale=scale, shift=shift, act="relu", out_dtype=out_dtype)
        return out.reshape(B, H, W, Cout)
    kernel = functools.partial(_conv3x3_kernel, H=H, W=W)
    return pl.pallas_call(
        kernel,
        out_shape=jax.ShapeDtypeStruct((B, H, W, Cout), out_dtype),
        grid=(B,),
        in_specs=[pl.BlockSpec((None, H + 2, W + 2, Cin), lambda b: (b, 0, 0, 0)),
                  pl.BlockSpec((9 * Cin, Cout), lambda b: (0, 0)),
                  pl.BlockSpec((1, Cout), lambda b: (0, 0)),
                  pl.BlockSpec((1, Cout), lambda b: (0, 0))],
        out_specs=pl.BlockSpec((None, H, W, Cout), lambda b: (b, 0, 0, 0)),
        compiler_params=pltpu.CompilerParams(dimension_semantics=("parallel",)),
    )(xp, w2d, scale.astype(jnp.float32).reshape(1, Cout),
      shift.astype(jnp.float32).reshape(1, Cout))


# ----------------------------------------------------------------------------
# ConvTranspose2d(4, stride=2, padding=1) via fused sub-pixel phase matmuls
# ----------------------------------------------------------------------------
def make_deconv_phase_weights(w_hwio):
    """w_hwio[ky,kx,ci,co] == torch ConvTranspose2d.weight[ci,co,ky,kx]  ->  (4, 4*Cin, Cout)."""
    ph = []
    for py in (0, 1):
        for px in (0, 1):
            ph.append(jnp.concatenate(
                [w_hwio[(3 - py) - 2 * ty, (3 - px) - 2 * tx] for ty, tx in _DECONV_TAPS],
                axis=0))
    return jnp.stack(ph, axis=0)


def _deconv_kernel(x_ref, w_ref, b_ref, o_ref, *, H, W):
    xp = x_ref[...].astype(jnp.bfloat16)            # (H+2, W+2, Cin)
    Cin = xp.shape[-1]
    Cout = w_ref.shape[-1]
    bias = b_ref[...]
    for py in (0, 1):
        phase_cols = []
        for px in (0, 1):
            cols = jnp.concatenate(
                [xp[py + ty:py + ty + H, px + tx:px + tx + W, :] for ty, tx in _DECONV_TAPS],
                axis=-1).reshape(H * W, 4 * Cin)
            y = jnp.dot(cols, w_ref[py * 2 + px],
                        preferred_element_type=jnp.float32) + bias
            phase_cols.append(y.reshape(H, W, Cout))
        # (H, W, 2*Cout): px interleaved along lanes; single lane-dense store per py slab
        o_ref[:, py, :, :] = jnp.concatenate(phase_cols, axis=-1)


def _deconv_unfused(x, wph, bias):
    B, H, W, Cin = x.shape
    Cout = wph.shape[-1]
    xp = jnp.pad(x, ((0, 0), (1, 1), (1, 1), (0, 0)))
    rows = []
    for py in (0, 1):
        cols_px = []
        for px in (0, 1):
            cols = jnp.concatenate(
                [xp[:, py + ty:py + ty + H, px + tx:px + tx + W, :] for ty, tx in _DECONV_TAPS],
                axis=-1)
            y = pallas_matmul(cols.reshape(B * H * W, 4 * Cin), wph[py * 2 + px], shift=bias)
            cols_px.append(y.reshape(B, H, W, Cout))
        rows.append(jnp.stack(cols_px, axis=3))                   # (B, H, W, 2, Cout)
    out = jnp.stack(rows, axis=2)                                 # (B, H, 2, W, 2, Cout)
    return out.reshape(B, 2 * H, 2 * W, Cout)


def conv_transpose2d_k4s2p1(x, wph, bias):
    """wph: phase weights (4, 4*Cin, Cout).  Output (B, 2H, 2W, Cout), f32."""
    B, H, W, Cin = x.shape
    Cout = wph.shape[-1]
    if wph.size * wph.dtype.itemsize > _FUSE_WEIGHT_BYTES or W % _SUBLANE != 0:
        return _deconv_unfused(x, wph, bias)
    xp = jnp.pad(x, ((0, 0), (1, 1), (1, 1), (0, 0)))
    kernel = functools.partial(_deconv_kernel, H=H, W=W)
    out5 = pl.pallas_call(
        kernel,
        out_shape=jax.ShapeDtypeStruct((B, H, 2, W, 2 * Cout), jnp.float32),
        grid=(B,),
        in_specs=[pl.BlockSpec((None, H + 2, W + 2, Cin), lambda b: (b, 0, 0, 0)),
                  pl.BlockSpec((4, 4 * Cin, Cout), lambda b: (0, 0, 0)),
                  pl.BlockSpec((1, Cout), lambda b: (0, 0))],
        out_specs=pl.BlockSpec((None, H, 2, W, 2 * Cout), lambda b: (b, 0, 0, 0, 0)),
        compiler_params=pltpu.CompilerParams(dimension_semantics=("parallel",)),
    )(xp, wph, bias.astype(jnp.float32).reshape(1, Cout))
    return out5.reshape(B, 2 * H, 2 * W, Cout)     # contiguous (metadata-only) reshape


# ----------------------------------------------------------------------------
# JAX glue
# ----------------------------------------------------------------------------
def bn_affine(gamma, beta, bias=None, eps=_BN_EPS):
    # TODO(synk): BatchNorm folded as eval-mode with running_mean=0, running_var=1;
    # trained running statistics / train-mode batch statistics are not reproduced.
    s = gamma * (1.0 + eps) ** -0.5
    t = beta if bias is None else bias * s + beta
    return s, t


def conv1x1(x, w, scale=None, shift=None, act="none", out_dtype=jnp.float32):
    B, H, W, C = x.shape
    out = pallas_matmul(x.reshape(-1, C), w, scale=scale, shift=shift, act=act,
                        out_dtype=out_dtype)
    return out.reshape(B, H, W, w.shape[1])


def add_pos_embedding(x, h_emb, w_emb):
    B, H, W, C = x.shape
    embed_h = w_emb[:H]                              # (H, C//2)
    embed_w = h_emb[:W]                              # (W, C//2)
    pe = jnp.concatenate(
        [jnp.broadcast_to(embed_w[None, :, :], (H, W, C // 2)),
         jnp.broadcast_to(embed_h[:, None, :], (H, W, C // 2))], axis=-1)
    return x + pe[None]


# ----------------------------------------------------------------------------
# Module forwards
# ----------------------------------------------------------------------------
def dynamic_conv_fwd(p, x):
    B, H, W, C = x.shape
    s3c, t3c = bn_affine(p['bn_g'], p['bn_b'],
                         jnp.concatenate([p['b3'], p['b15'], p['b51']]))
    y = pallas_dynamic_conv(x, p['w3'], p['w15'], p['w51'], s3c, t3c)
    # TODO(synk): exact-erf GELU kept in plain JAX (matches nn.GELU default).
    y = jax.nn.gelu(y, approximate=False)
    out = pallas_matmul(y.reshape(B * H * W, 3 * C), p['w1'], shift=p['b1'])
    return out.reshape(B, H, W, C)


def mha_fwd(p, x1, x2, heads):
    # NOTE: `cross = not x1.equal(x2)` in torch is data-dependent; in this module's call
    # graph x1 and x2 are always different feature maps, so cross is structurally True.
    B, L, C = x1.shape
    A = p['wq'].shape[1]
    x1f = x1.reshape(B * L, C)
    x2f = x2.reshape(B * L, C)
    fs, ft = bn_affine(p['f_bn_g'], p['f_bn_b'], p['fb'])
    # fuse_conv: prologue x1*(x2-x1) fused into the 1x1-conv matmul (+BN+ReLU epilogue)
    fused = pallas_matmul(x1f, p['fw'], a_aux=x2f, prologue="muldiff",
                          scale=fs, shift=ft, act="relu", out_dtype=jnp.bfloat16)
    q = pallas_matmul(x1f, p['wq'], shift=p['bq'], out_dtype=jnp.bfloat16)
    kv = pallas_matmul(fused, p['wkv'], shift=p['bkv'], out_dtype=jnp.bfloat16)  # K|V fused
    oh = pallas_attention(q.reshape(B, L, A), kv.reshape(B, L, 2 * A), heads)    # (B,L,A) bf16
    out = pallas_matmul(oh.reshape(B * L, A), p['wo'], shift=p['bo'])
    return out.reshape(B, L, p['wo'].shape[1])


def transformer_fwd(p, x1, x2, heads, outer_res=None):
    # x3 == x2 at every call site; under cross-attention the value path is rebuilt from
    # the fused feature, so the reference's third dynamic-conv branch is dead compute
    # and skipped (output-identical).
    B, L, C = x1.shape
    h = w = int(round(L ** 0.5))
    x1f = x1.reshape(B, h, w, C)
    x2f = x2.reshape(B, h, w, C)
    x1f = x1f + dynamic_conv_fwd(p['qdc'], x1f)
    x2f = x2f + dynamic_conv_fwd(p['kdc'], x2f)
    x1t = x1f.reshape(B, L, C)
    x2t = x2f.reshape(B, L, C)
    att = mha_fwd(p['att'], x1t, x2t, heads)
    x = pallas_layernorm_add(att.reshape(B * L, C), x1t.reshape(B * L, C),
                             p['ln1_g'], p['ln1_b'])
    ff = pallas_matmul(x, p['ff_w1'], shift=p['ff_b1'], act="relu", out_dtype=jnp.bfloat16)
    ff = pallas_matmul(ff, p['ff_w2'], shift=p['ff_b2'])
    post = None if outer_res is None else outer_res.reshape(B * L, C)
    x = pallas_layernorm_add(ff, x, p['ln2_g'], p['ln2_b'], post=post)
    return x.reshape(B, L, C)


def cd_neck_s0(params, img1_list, img2_list, heads):
    f1 = add_pos_embedding(img1_list[-1], params['h_emb_cd'], params['w_emb_cd'])
    f2 = add_pos_embedding(img2_list[-1], params['h_emb_cd'], params['w_emb_cd'])
    B, H, W, C = f1.shape
    L = H * W
    t1 = f1.reshape(B, L, C)
    t2 = f2.reshape(B, L, C)
    for pair in params['cd_tr']:
        t1 = transformer_fwd(pair['A'], t1, t2, heads, outer_res=t1)   # fused "+ t1"
        t2 = transformer_fwd(pair['B'], t2, t1, heads, outer_res=t2)   # fused "+ t2"
    img1_list = img1_list[:-1] + [t1.reshape(B, H, W, C)]
    img2_list = img2_list[:-1] + [t2.reshape(B, H, W, C)]
    return img1_list, img2_list


def cc_neck_s0(params, f1, f2):
    f1 = add_pos_embedding(f1, params['h_emb'], params['w_emb'])
    f2 = add_pos_embedding(f2, params['h_emb'], params['w_emb'])
    return f1, f2


def prepare_caption(params, img1, img2, heads):
    B, H, W, C = img1.shape
    L = H * W
    sa1 = img1.reshape(B, L, C)
    sa2 = img2.reshape(B, L, C)
    tr1, tr2 = sa1, sa2
    for layer in params['cap_tr']:
        tr1 = transformer_fwd(layer['l'], sa1, sa2, heads)
        tr2 = transformer_fwd(layer['m'], sa2, sa1, heads)
        sa1, sa2 = tr1, tr2
    return tr1.reshape(B, H, W, C), tr2.reshape(B, H, W, C)


def change_detection(params, img1_list, img2_list):
    n = len(img1_list)
    fus_list = []
    for k in range(n):
        a, b = img1_list[k], img2_list[k]
        B, H, W, C = a.shape
        cd = params['conv_dif'][k]
        s, t = bn_affine(cd['bn_g'], cd['bn_b'], cd['b'])
        # conv_dif: (b-a) diff prologue + BN epilogue + per-row cosine(a,b) fused in-kernel
        dif = pallas_matmul(a.reshape(-1, C), cd['w'], a_aux=b.reshape(-1, C),
                            prologue="diff", add_cosine=True,
                            scale=s, shift=t).reshape(B, H, W, C)
        fus = jnp.concatenate([a, dif, b], axis=-1)
        cf = params['conv_fuse'][k]
        s, t = bn_affine(cf['bn_g'], cf['bn_b'], cf['b1'])
        fus = conv3x3_bn_relu(fus, cf['w1'], s, t, out_dtype=jnp.bfloat16)
        fus = conv1x1(fus, cf['w2'], shift=cf['b2'])
        fus_list.append(fus)

    def apply_to_fused(k, x):
        tf = params['to_fused'][k]
        s, t = bn_affine(tf['bn_g'], tf['bn_b'], tf['b1'])
        y = conv1x1(x, tf['w1'], scale=s, shift=t, act="relu", out_dtype=jnp.bfloat16)
        return conv_transpose2d_k4s2p1(y, tf['wt_ph'], tf['bt'])

    up = apply_to_fused(n - 1, fus_list[-1])
    img_fus = up
    for i in range(n - 1, 0, -1):
        i = i - 1
        img_fus = fus_list[i] + up
        img_fus = apply_to_fused(i, img_fus)
        up = img_fus
    ts = params['to_seg']
    seg = conv_transpose2d_k4s2p1(img_fus, ts['wt_ph'], ts['bt'])
    seg = conv1x1(seg, ts['w'], shift=ts['b'])
    return seg


def attentive_encoder_forward(params, img1_list, img2_list, heads):
    cd1, cd2 = list(img1_list[:4]), list(img2_list[:4])
    cc1, cc2 = img1_list[-1], img2_list[-1]
    cd1, cd2 = cd_neck_s0(params, cd1, cd2, heads)
    cc1, cc2 = cc_neck_s0(params, cc1, cc2)
    img1_cap, img2_cap = prepare_caption(params, cc1, cc2, heads)
    seg = change_detection(params, cd1, cd2)
    return img1_cap, img2_cap, seg


# ----------------------------------------------------------------------------
# Deterministic synthetic parameter init (matmul weights pre-cast to bf16,
# ConvTranspose weights pre-packed into phase form once)
# ----------------------------------------------------------------------------
def init_params(key, n_layers, feature_size, heads):
    h_feat, w_feat, channels = feature_size
    dims = [64, 128, 320, 512]
    keys = iter(jax.random.split(key, 512))
    bf = jnp.bfloat16

    def nrm(shape, scale=0.02, dtype=jnp.float32):
        return (jax.random.normal(next(keys), shape, jnp.float32) * scale).astype(dtype)

    def init_dynconv(dim):
        return dict(w3=nrm((3, 3, dim)), b3=jnp.zeros((dim,)),
                    w15=nrm((1, 5, dim)), b15=jnp.zeros((dim,)),
                    w51=nrm((5, 1, dim)), b51=jnp.zeros((dim,)),
                    bn_g=jnp.ones((3 * dim,)), bn_b=jnp.zeros((3 * dim,)),
                    w1=nrm((3 * dim, dim), dtype=bf), b1=jnp.zeros((dim,)))

    def init_mha(dim_q, dim_kv, att_dim):
        return dict(wq=nrm((dim_q, att_dim), dtype=bf), bq=jnp.zeros((att_dim,)),
                    wkv=nrm((dim_kv, 2 * att_dim), dtype=bf), bkv=jnp.zeros((2 * att_dim,)),
                    wo=nrm((att_dim, dim_q), dtype=bf), bo=jnp.zeros((dim_q,)),
                    fw=nrm((dim_kv, dim_kv), dtype=bf), fb=jnp.zeros((dim_kv,)),
                    f_bn_g=jnp.ones((dim_kv,)), f_bn_b=jnp.zeros((dim_kv,)))

    def init_transformer(dim_q, dim_kv, att_dim, hidden):
        return dict(att=init_mha(dim_q, dim_kv, att_dim),
                    ff_w1=nrm((dim_q, hidden), dtype=bf), ff_b1=jnp.zeros((hidden,)),
                    ff_w2=nrm((hidden, dim_q), dtype=bf), ff_b2=jnp.zeros((dim_q,)),
                    ln1_g=jnp.ones((dim_q,)), ln1_b=jnp.zeros((dim_q,)),
                    ln2_g=jnp.ones((dim_q,)), ln2_b=jnp.zeros((dim_q,)),
                    qdc=init_dynconv(dim_q), kdc=init_dynconv(dim_kv))

    def init_to_fused(i, d):
        cout = 2 * dims[max(i - 1, 0)]
        return dict(w1=nrm((2 * d, 2 * d), dtype=bf), b1=jnp.zeros((2 * d,)),
                    bn_g=jnp.ones((2 * d,)), bn_b=jnp.zeros((2 * d,)),
                    wt_ph=make_deconv_phase_weights(nrm((4, 4, 2 * d, cout))).astype(bf),
                    bt=jnp.zeros((cout,)))

    c = channels
    d_last = dims[-1]
    params = dict(
        h_emb=nrm((h_feat, c // 2)), w_emb=nrm((w_feat, c // 2)),
        h_emb_cd=nrm((h_feat, c // 2)), w_emb_cd=nrm((w_feat, c // 2)),
        cap_tr=[dict(l=init_transformer(c, c, c, 4 * c),
                     m=init_transformer(c, c, c, 4 * c))
                for _ in range(n_layers)],
        cd_tr=[dict(A=init_transformer(d_last, d_last, d_last, 4 * d_last),
                    B=init_transformer(d_last, d_last, d_last, 4 * d_last))
               for _ in range(3)],
        conv_dif=[dict(w=nrm((d, d), dtype=bf), b=jnp.zeros((d,)),
                       bn_g=jnp.ones((d,)), bn_b=jnp.zeros((d,)))
                  for d in dims],
        conv_fuse=[dict(w1=nrm((3, 3, 3 * d, 2 * d), dtype=bf), b1=jnp.zeros((2 * d,)),
                        bn_g=jnp.ones((2 * d,)), bn_b=jnp.zeros((2 * d,)),
                        w2=nrm((2 * d, 2 * d), dtype=bf), b2=jnp.zeros((2 * d,)))
                   for d in dims],
        to_fused=[init_to_fused(i, d) for i, d in enumerate(dims)],
        to_seg=dict(wt_ph=make_deconv_phase_weights(
                        nrm((4, 4, 2 * dims[0], dims[0]))).astype(bf),
                    bt=jnp.zeros((dims[0],)),
                    w=nrm((dims[0], 2), dtype=bf), b=jnp.zeros((2,))),
    )
    return params


# ----------------------------------------------------------------------------
if __name__ == "__main__":
    key = jax.random.PRNGKey(0)
    B = 2
    heads = 8
    n_layers = 1
    dims = [64, 128, 320, 512]          # hardcoded in the torch module
    spatial = [16, 8, 4, 2]             # pyramid levels (each level halves)
    feature_size = (2, 2, 512)          # (h_feat, w_feat, channels) of the last level

    kp, k1, k2 = jax.random.split(key, 3)
    params = init_params(kp, n_layers, feature_size, heads)

    ks1 = jax.random.split(k1, 4)
    ks2 = jax.random.split(k2, 4)
    img1_list = [jax.random.normal(ks1[i], (B, s, s, d), jnp.float32)
                 for i, (d, s) in enumerate(zip(dims, spatial))]
    img2_list = [jax.random.normal(ks2[i], (B, s, s, d), jnp.float32)
                 for i, (d, s) in enumerate(zip(dims, spatial))]

    img1_cap, img2_cap, seg = attentive_encoder_forward(params, img1_list, img2_list, heads)
    jax.block_until_ready((img1_cap, img2_cap, seg))
    assert img1_cap.shape == (B, 2, 2, 512)
    assert img2_cap.shape == (B, 2, 2, 512)
    assert seg.shape == (B, 4 * spatial[0], 4 * spatial[0], 2)   # NHWC, NUM_CLASS=2
    print("KERNEL_OK")
</pallas_src>

<mosaic_0001>
module attributes {stable_mosaic.version = 11 : i64} {
  func.func @_dynconv_kernel(%arg0: i32, %arg1: memref<1x6x6x512xf32, #tpu.memory_space<vmem>>, %arg2: memref<3x3x512xf32, #tpu.memory_space<vmem>>, %arg3: memref<1x5x512xf32, #tpu.memory_space<vmem>>, %arg4: memref<5x1x512xf32, #tpu.memory_space<vmem>>, %arg5: memref<3x512xf32, #tpu.memory_space<vmem>>, %arg6: memref<3x512xf32, #tpu.memory_space<vmem>>, %arg7: memref<1x2x2x1536xf32, #tpu.memory_space<vmem>>) attributes {dimension_semantics = [#tpu.dimension_semantics<parallel>], iteration_bounds = array<i64: 2>, scalar_prefetch = 0 : i64, scratch_operands = 0 : i64, tpu.core_type = #tpu.core_type<tc>, window_params = [{transform_indices = @transform_0, window_bounds = array<i64: 1, 6, 6, 512>}, {pipeline_mode = #tpu.pipeline_mode<synchronous>, transform_indices = @transform_1, window_bounds = array<i64: 3, 3, 512>}, {pipeline_mode = #tpu.pipeline_mode<synchronous>, transform_indices = @transform_2, window_bounds = array<i64: 1, 5, 512>}, {pipeline_mode = #tpu.pipeline_mode<synchronous>, transform_indices = @transform_3, window_bounds = array<i64: 5, 1, 512>}, {pipeline_mode = #tpu.pipeline_mode<synchronous>, transform_indices = @transform_4, window_bounds = array<i64: 3, 512>}, {pipeline_mode = #tpu.pipeline_mode<synchronous>, transform_indices = @transform_5, window_bounds = array<i64: 3, 512>}, {transform_indices = @transform_6, window_bounds = array<i64: 1, 2, 2, 1536>}]} {
    %c0 = arith.constant 0 : index
    %c0_0 = arith.constant 0 : index
    %c0_1 = arith.constant 0 : index
    %c0_2 = arith.constant 0 : index
    %0 = vector.load %arg1[%c0, %c0_0, %c0_1, %c0_2] : memref<1x6x6x512xf32, #tpu.memory_space<vmem>>, vector<1x6x6x512xf32>
    %1 = vector.shape_cast %0 : vector<1x6x6x512xf32> to vector<6x6x512xf32>
    %c0_3 = arith.constant 0 : index
    %c0_4 = arith.constant 0 : index
    %c0_5 = arith.constant 0 : index
    %2 = vector.load %arg2[%c0_3, %c0_4, %c0_5] : memref<3x3x512xf32, #tpu.memory_space<vmem>>, vector<3x3x512xf32>
    %c0_6 = arith.constant 0 : index
    %c0_7 = arith.constant 0 : index
    %c0_8 = arith.constant 0 : index
    %3 = vector.load %arg3[%c0_6, %c0_7, %c0_8] : memref<1x5x512xf32, #tpu.memory_space<vmem>>, vector<1x5x512xf32>
    %c0_9 = arith.constant 0 : index
    %c0_10 = arith.constant 0 : index
    %c0_11 = arith.constant 0 : index
    %4 = vector.load %arg4[%c0_9, %c0_10, %c0_11] : memref<5x1x512xf32, #tpu.memory_space<vmem>>, vector<5x1x512xf32>
    %cst = arith.constant 0.000000e+00 : f32
    %5 = vector.broadcast %cst : f32 to vector<2x2x512xf32>
    %6 = vector.extract_strided_slice %1 {offsets = [1, 1, 0], sizes = [2, 2, 512], strides = [1, 1, 1]} : vector<6x6x512xf32> to vector<2x2x512xf32>
    %7 = vector.extract_strided_slice %2 {offsets = [0, 0, 0], sizes = [1, 1, 512], strides = [1, 1, 1]} : vector<3x3x512xf32> to vector<1x1x512xf32>
    %8 = vector.shape_cast %7 : vector<1x1x512xf32> to vector<512xf32>
    %9 = vector.shape_cast %8 : vector<512xf32> to vector<1x1x512xf32>
    %10 = vector.broadcast %9 : vector<1x1x512xf32> to vector<2x2x512xf32>
    %11 = arith.mulf %6, %10 : vector<2x2x512xf32>
    %12 = arith.addf %5, %11 : vector<2x2x512xf32>
    %13 = vector.extract_strided_slice %1 {offsets = [1, 2, 0], sizes = [2, 2, 512], strides = [1, 1, 1]} : vector<6x6x512xf32> to vector<2x2x512xf32>
    %14 = vector.extract_strided_slice %2 {offsets = [0, 1, 0], sizes = [1, 1, 512], strides = [1, 1, 1]} : vector<3x3x512xf32> to vector<1x1x512xf32>
    %15 = vector.shape_cast %14 : vector<1x1x512xf32> to vector<512xf32>
    %16 = vector.shape_cast %15 : vector<512xf32> to vector<1x1x512xf32>
    %17 = vector.broadcast %16 : vector<1x1x512xf32> to vector<2x2x512xf32>
    %18 = arith.mulf %13, %17 : vector<2x2x512xf32>
    %19 = arith.addf %12, %18 : vector<2x2x512xf32>
    %20 = vector.extract_strided_slice %1 {offsets = [1, 3, 0], sizes = [2, 2, 512], strides = [1, 1, 1]} : vector<6x6x512xf32> to vector<2x2x512xf32>
    %21 = vector.extract_strided_slice %2 {offsets = [0, 2, 0], sizes = [1, 1, 512], strides = [1, 1, 1]} : vector<3x3x512xf32> to vector<1x1x512xf32>
    %22 = vector.shape_cast %21 : vector<1x1x512xf32> to vector<512xf32>
    %23 = vector.shape_cast %22 : vector<512xf32> to vector<1x1x512xf32>
    %24 = vector.broadcast %23 : vector<1x1x512xf32> to vector<2x2x512xf32>
    %25 = arith.mulf %20, %24 : vector<2x2x512xf32>
    %26 = arith.addf %19, %25 : vector<2x2x512xf32>
    %27 = vector.extract_strided_slice %1 {offsets = [2, 1, 0], sizes = [2, 2, 512], strides = [1, 1, 1]} : vector<6x6x512xf32> to vector<2x2x512xf32>
    %28 = vector.extract_strided_slice %2 {offsets = [1, 0, 0], sizes = [1, 1, 512], strides = [1, 1, 1]} : vector<3x3x512xf32> to vector<1x1x512xf32>
    %29 = vector.shape_cast %28 : vector<1x1x512xf32> to vector<512xf32>
    %30 = vector.shape_cast %29 : vector<512xf32> to vector<1x1x512xf32>
    %31 = vector.broadcast %30 : vector<1x1x512xf32> to vector<2x2x512xf32>
    %32 = arith.mulf %27, %31 : vector<2x2x512xf32>
    %33 = arith.addf %26, %32 : vector<2x2x512xf32>
    %34 = vector.extract_strided_slice %1 {offsets = [2, 2, 0], sizes = [2, 2, 512], strides = [1, 1, 1]} : vector<6x6x512xf32> to vector<2x2x512xf32>
    %35 = vector.extract_strided_slice %2 {offsets = [1, 1, 0], sizes = [1, 1, 512], strides = [1, 1, 1]} : vector<3x3x512xf32> to vector<1x1x512xf32>
    %36 = vector.shape_cast %35 : vector<1x1x512xf32> to vector<512xf32>
    %37 = vector.shape_cast %36 : vector<512xf32> to vector<1x1x512xf32>
    %38 = vector.broadcast %37 : vector<1x1x512xf32> to vector<2x2x512xf32>
    %39 = arith.mulf %34, %38 : vector<2x2x512xf32>
    %40 = arith.addf %33, %39 : vector<2x2x512xf32>
    %41 = vector.extract_strided_slice %1 {offsets = [2, 3, 0], sizes = [2, 2, 512], strides = [1, 1, 1]} : vector<6x6x512xf32> to vector<2x2x512xf32>
    %42 = vector.extract_strided_slice %2 {offsets = [1, 2, 0], sizes = [1, 1, 512], strides = [1, 1, 1]} : vector<3x3x512xf32> to vector<1x1x512xf32>
    %43 = vector.shape_cast %42 : vector<1x1x512xf32> to vector<512xf32>
    %44 = vector.shape_cast %43 : vector<512xf32> to vector<1x1x512xf32>
    %45 = vector.broadcast %44 : vector<1x1x512xf32> to vector<2x2x512xf32>
    %46 = arith.mulf %41, %45 : vector<2x2x512xf32>
    %47 = arith.addf %40, %46 : vector<2x2x512xf32>
    %48 = vector.extract_strided_slice %1 {offsets = [3, 1, 0], sizes = [2, 2, 512], strides = [1, 1, 1]} : vector<6x6x512xf32> to vector<2x2x512xf32>
    %49 = vector.extract_strided_slice %2 {offsets = [2, 0, 0], sizes = [1, 1, 512], strides = [1, 1, 1]} : vector<3x3x512xf32> to vector<1x1x512xf32>
    %50 = vector.shape_cast %49 : vector<1x1x512xf32> to vector<512xf32>
    %51 = vector.shape_cast %50 : vector<512xf32> to vector<1x1x512xf32>
    %52 = vector.broadcast %51 : vector<1x1x512xf32> to vector<2x2x512xf32>
    %53 = arith.mulf %48, %52 : vector<2x2x512xf32>
    %54 = arith.addf %47, %53 : vector<2x2x512xf32>
    %55 = vector.extract_strided_slice %1 {offsets = [3, 2, 0], sizes = [2, 2, 512], strides = [1, 1, 1]} : vector<6x6x512xf32> to vector<2x2x512xf32>
    %56 = vector.extract_strided_slice %2 {offsets = [2, 1, 0], sizes = [1, 1, 512], strides = [1, 1, 1]} : vector<3x3x512xf32> to vector<1x1x512xf32>
    %57 = vector.shape_cast %56 : vector<1x1x512xf32> to vector<512xf32>
    %58 = vector.shape_cast %57 : vector<512xf32> to vector<1x1x512xf32>
    %59 = vector.broadcast %58 : vector<1x1x512xf32> to vector<2x2x512xf32>
    %60 = arith.mulf %55, %59 : vector<2x2x512xf32>
    %61 = arith.addf %54, %60 : vector<2x2x512xf32>
    %62 = vector.extract_strided_slice %1 {offsets = [3, 3, 0], sizes = [2, 2, 512], strides = [1, 1, 1]} : vector<6x6x512xf32> to vector<2x2x512xf32>
    %63 = vector.extract_strided_slice %2 {offsets = [2, 2, 0], sizes = [1, 1, 512], strides = [1, 1, 1]} : vector<3x3x512xf32> to vector<1x1x512xf32>
    %64 = vector.shape_cast %63 : vector<1x1x512xf32> to vector<512xf32>
    %65 = vector.shape_cast %64 : vector<512xf32> to vector<1x1x512xf32>
    %66 = vector.broadcast %65 : vector<1x1x512xf32> to vector<2x2x512xf32>
    %67 = arith.mulf %62, %66 : vector<2x2x512xf32>
    %68 = arith.addf %61, %67 : vector<2x2x512xf32>
    %cst_12 = arith.constant 0.000000e+00 : f32
    %69 = vector.broadcast %cst_12 : f32 to vector<2x2x512xf32>
    %70 = vector.extract_strided_slice %1 {offsets = [2, 0, 0], sizes = [2, 2, 512], strides = [1, 1, 1]} : vector<6x6x512xf32> to vector<2x2x512xf32>
    %71 = vector.extract_strided_slice %3 {offsets = [0, 0, 0], sizes = [1, 1, 512], strides = [1, 1, 1]} : vector<1x5x512xf32> to vector<1x1x512xf32>
    %72 = vector.shape_cast %71 : vector<1x1x512xf32> to vector<512xf32>
    %73 = vector.shape_cast %72 : vector<512xf32> to vector<1x1x512xf32>
    %74 = vector.broadcast %73 : vector<1x1x512xf32> to vector<2x2x512xf32>
    %75 = arith.mulf %70, %74 : vector<2x2x512xf32>
    %76 = arith.addf %69, %75 : vector<2x2x512xf32>
    %77 = vector.extract_strided_slice %1 {offsets = [2, 1, 0], sizes = [2, 2, 512], strides = [1, 1, 1]} : vector<6x6x512xf32> to vector<2x2x512xf32>
    %78 = vector.extract_strided_slice %3 {offsets = [0, 1, 0], sizes = [1, 1, 512], strides = [1, 1, 1]} : vector<1x5x512xf32> to vector<1x1x512xf32>
    %79 = vector.shape_cast %78 : vector<1x1x512xf32> to vector<512xf32>
    %80 = vector.shape_cast %79 : vector<512xf32> to vector<1x1x512xf32>
    %81 = vector.broadcast %80 : vector<1x1x512xf32> to vector<2x2x512xf32>
    %82 = arith.mulf %77, %81 : vector<2x2x512xf32>
    %83 = arith.addf %76, %82 : vector<2x2x512xf32>
    %84 = vector.extract_strided_slice %1 {offsets = [2, 2, 0], sizes = [2, 2, 512], strides = [1, 1, 1]} : vector<6x6x512xf32> to vector<2x2x512xf32>
    %85 = vector.extract_strided_slice %3 {offsets = [0, 2, 0], sizes = [1, 1, 512], strides = [1, 1, 1]} : vector<1x5x512xf32> to vector<1x1x512xf32>
    %86 = vector.shape_cast %85 : vector<1x1x512xf32> to vector<512xf32>
    %87 = vector.shape_cast %86 : vector<512xf32> to vector<1x1x512xf32>
    %88 = vector.broadcast %87 : vector<1x1x512xf32> to vector<2x2x512xf32>
    %89 = arith.mulf %84, %88 : vector<2x2x512xf32>
    %90 = arith.addf %83, %89 : vector<2x2x512xf32>
    %91 = vector.extract_strided_slice %1 {offsets = [2, 3, 0], sizes = [2, 2, 512], strides = [1, 1, 1]} : vector<6x6x512xf32> to vector<2x2x512xf32>
    %92 = vector.extract_strided_slice %3 {offsets = [0, 3, 0], sizes = [1, 1, 512], strides = [1, 1, 1]} : vector<1x5x512xf32> to vector<1x1x512xf32>
    %93 = vector.shape_cast %92 : vector<1x1x512xf32> to vector<512xf32>
    %94 = vector.shape_cast %93 : vector<512xf32> to vector<1x1x512xf32>
    %95 = vector.broadcast %94 : vector<1x1x512xf32> to vector<2x2x512xf32>
    %96 = arith.mulf %91, %95 : vector<2x2x512xf32>
    %97 = arith.addf %90, %96 : vector<2x2x512xf32>
    %98 = vector.extract_strided_slice %1 {offsets = [2, 4, 0], sizes = [2, 2, 512], strides = [1, 1, 1]} : vector<6x6x512xf32> to vector<2x2x512xf32>
    %99 = vector.extract_strided_slice %3 {offsets = [0, 4, 0], sizes = [1, 1, 512], strides = [1, 1, 1]} : vector<1x5x512xf32> to vector<1x1x512xf32>
    %100 = vector.shape_cast %99 : vector<1x1x512xf32> to vector<512xf32>
    %101 = vector.shape_cast %100 : vector<512xf32> to vector<1x1x512xf32>
    %102 = vector.broadcast %101 : vector<1x1x512xf32> to vector<2x2x512xf32>
    %103 = arith.mulf %98, %102 : vector<2x2x512xf32>
    %104 = arith.addf %97, %103 : vector<2x2x512xf32>
    %cst_13 = arith.constant 0.000000e+00 : f32
    %105 = vector.broadcast %cst_13 : f32 to vector<2x2x512xf32>
    %106 = vector.extract_strided_slice %1 {offsets = [0, 2, 0], sizes = [2, 2, 512], strides = [1, 1, 1]} : vector<6x6x512xf32> to vector<2x2x512xf32>
    %107 = vector.extract_strided_slice %4 {offsets = [0, 0, 0], sizes = [1, 1, 512], strides = [1, 1, 1]} : vector<5x1x512xf32> to vector<1x1x512xf32>
    %108 = vector.shape_cast %107 : vector<1x1x512xf32> to vector<512xf32>
    %109 = vector.shape_cast %108 : vector<512xf32> to vector<1x1x512xf32>
    %110 = vector.broadcast %109 : vector<1x1x512xf32> to vector<2x2x512xf32>
    %111 = arith.mulf %106, %110 : vector<2x2x512xf32>
    %112 = arith.addf %105, %111 : vector<2x2x512xf32>
    %113 = vector.extract_strided_slice %1 {offsets = [1, 2, 0], sizes = [2, 2, 512], strides = [1, 1, 1]} : vector<6x6x512xf32> to vector<2x2x512xf32>
    %114 = vector.extract_strided_slice %4 {offsets = [1, 0, 0], sizes = [1, 1, 512], strides = [1, 1, 1]} : vector<5x1x512xf32> to vector<1x1x512xf32>
    %115 = vector.shape_cast %114 : vector<1x1x512xf32> to vector<512xf32>
    %116 = vector.shape_cast %115 : vector<512xf32> to vector<1x1x512xf32>
    %117 = vector.broadcast %116 : vector<1x1x512xf32> to vector<2x2x512xf32>
    %118 = arith.mulf %113, %117 : vector<2x2x512xf32>
    %119 = arith.addf %112, %118 : vector<2x2x512xf32>
    %120 = vector.extract_strided_slice %1 {offsets = [2, 2, 0], sizes = [2, 2, 512], strides = [1, 1, 1]} : vector<6x6x512xf32> to vector<2x2x512xf32>
    %121 = vector.extract_strided_slice %4 {offsets = [2, 0, 0], sizes = [1, 1, 512], strides = [1, 1, 1]} : vector<5x1x512xf32> to vector<1x1x512xf32>
    %122 = vector.shape_cast %121 : vector<1x1x512xf32> to vector<512xf32>
    %123 = vector.shape_cast %122 : vector<512xf32> to vector<1x1x512xf32>
    %124 = vector.broadcast %123 : vector<1x1x512xf32> to vector<2x2x512xf32>
    %125 = arith.mulf %120, %124 : vector<2x2x512xf32>
    %126 = arith.addf %119, %125 : vector<2x2x512xf32>
    %127 = vector.extract_strided_slice %1 {offsets = [3, 2, 0], sizes = [2, 2, 512], strides = [1, 1, 1]} : vector<6x6x512xf32> to vector<2x2x512xf32>
    %128 = vector.extract_strided_slice %4 {offsets = [3, 0, 0], sizes = [1, 1, 512], strides = [1, 1, 1]} : vector<5x1x512xf32> to vector<1x1x512xf32>
    %129 = vector.shape_cast %128 : vector<1x1x512xf32> to vector<512xf32>
    %130 = vector.shape_cast %129 : vector<512xf32> to vector<1x1x512xf32>
    %131 = vector.broadcast %130 : vector<1x1x512xf32> to vector<2x2x512xf32>
    %132 = arith.mulf %127, %131 : vector<2x2x512xf32>
    %133 = arith.addf %126, %132 : vector<2x2x512xf32>
    %134 = vector.extract_strided_slice %1 {offsets = [4, 2, 0], sizes = [2, 2, 512], strides = [1, 1, 1]} : vector<6x6x512xf32> to vector<2x2x512xf32>
    %135 = vector.extract_strided_slice %4 {offsets = [4, 0, 0], sizes = [1, 1, 512], strides = [1, 1, 1]} : vector<5x1x512xf32> to vector<1x1x512xf32>
    %136 = vector.shape_cast %135 : vector<1x1x512xf32> to vector<512xf32>
    %137 = vector.shape_cast %136 : vector<512xf32> to vector<1x1x512xf32>
    %138 = vector.broadcast %137 : vector<1x1x512xf32> to vector<2x2x512xf32>
    %139 = arith.mulf %134, %138 : vector<2x2x512xf32>
    %140 = arith.addf %133, %139 : vector<2x2x512xf32>
    %c0_14 = arith.constant 0 : index
    %c0_15 = arith.constant 0 : index
    %141 = vector.load %arg5[%c0_14, %c0_15] : memref<3x512xf32, #tpu.memory_space<vmem>>, vector<1x512xf32>
    %142 = vector.shape_cast %141 : vector<1x512xf32> to vector<512xf32>
    %143 = vector.shape_cast %142 : vector<512xf32> to vector<1x1x512xf32>
    %144 = vector.broadcast %143 : vector<1x1x512xf32> to vector<2x2x512xf32>
    %145 = arith.mulf %68, %144 : vector<2x2x512xf32>
    %c0_16 = arith.constant 0 : index
    %c0_17 = arith.constant 0 : index
    %146 = vector.load %arg6[%c0_16, %c0_17] : memref<3x512xf32, #tpu.memory_space<vmem>>, vector<1x512xf32>
    %147 = vector.shape_cast %146 : vector<1x512xf32> to vector<512xf32>
    %148 = vector.shape_cast %147 : vector<512xf32> to vector<1x1x512xf32>
    %149 = vector.broadcast %148 : vector<1x1x512xf32> to vector<2x2x512xf32>
    %150 = arith.addf %145, %149 : vector<2x2x512xf32>
    %c0_18 = arith.constant 0 : index
    %c0_19 = arith.constant 0 : index
    %c0_20 = arith.constant 0 : index
    %c0_21 = arith.constant 0 : index
    %151 = vector.load %arg7[%c0_18, %c0_19, %c0_20, %c0_21] : memref<1x2x2x1536xf32, #tpu.memory_space<vmem>>, vector<1x2x2x512xf32>
    %152 = vector.shape_cast %151 : vector<1x2x2x512xf32> to vector<2x2x512xf32>
    %153 = vector.shape_cast %150 : vector<2x2x512xf32> to vector<1x2x2x512xf32>
    tpu.vector_store %arg7[%c0_18, %c0_19, %c0_20, %c0_21], %153 {strides = array<i32>} : memref<1x2x2x1536xf32, #tpu.memory_space<vmem>>, vector<1x2x2x512xf32>,
    %c1 = arith.constant 1 : index
    %c0_22 = arith.constant 0 : index
    %154 = vector.load %arg5[%c1, %c0_22] : memref<3x512xf32, #tpu.memory_space<vmem>>, vector<1x512xf32>
    %155 = vector.shape_cast %154 : vector<1x512xf32> to vector<512xf32>
    %156 = vector.shape_cast %155 : vector<512xf32> to vector<1x1x512xf32>
    %157 = vector.broadcast %156 : vector<1x1x512xf32> to vector<2x2x512xf32>
    %158 = arith.mulf %104, %157 : vector<2x2x512xf32>
    %c1_23 = arith.constant 1 : index
    %c0_24 = arith.constant 0 : index
    %159 = vector.load %arg6[%c1_23, %c0_24] : memref<3x512xf32, #tpu.memory_space<vmem>>, vector<1x512xf32>
    %160 = vector.shape_cast %159 : vector<1x512xf32> to vector<512xf32>
    %161 = vector.shape_cast %160 : vector<512xf32> to vector<1x1x512xf32>
    %162 = vector.broadcast %161 : vector<1x1x512xf32> to vector<2x2x512xf32>
    %163 = arith.addf %158, %162 : vector<2x2x512xf32>
    %c0_25 = arith.constant 0 : index
    %c0_26 = arith.constant 0 : index
    %c0_27 = arith.constant 0 : index
    %c512 = arith.constant 512 : index
    %164 = vector.load %arg7[%c0_25, %c0_26, %c0_27, %c512] : memref<1x2x2x1536xf32, #tpu.memory_space<vmem>>, vector<1x2x2x512xf32>
    %165 = vector.shape_cast %164 : vector<1x2x2x512xf32> to vector<2x2x512xf32>
    %166 = vector.shape_cast %163 : vector<2x2x512xf32> to vector<1x2x2x512xf32>
    tpu.vector_store %arg7[%c0_25, %c0_26, %c0_27, %c512], %166 {strides = array<i32>} : memref<1x2x2x1536xf32, #tpu.memory_space<vmem>>, vector<1x2x2x512xf32>,
    %c2 = arith.constant 2 : index
    %c0_28 = arith.constant 0 : index
    %167 = vector.load %arg5[%c2, %c0_28] : memref<3x512xf32, #tpu.memory_space<vmem>>, vector<1x512xf32>
    %168 = vector.shape_cast %167 : vector<1x512xf32> to vector<512xf32>
    %169 = vector.shape_cast %168 : vector<512xf32> to vector<1x1x512xf32>
    %170 = vector.broadcast %169 : vector<1x1x512xf32> to vector<2x2x512xf32>
    %171 = arith.mulf %140, %170 : vector<2x2x512xf32>
    %c2_29 = arith.constant 2 : index
    %c0_30 = arith.constant 0 : index
    %172 = vector.load %arg6[%c2_29, %c0_30] : memref<3x512xf32, #tpu.memory_space<vmem>>, vector<1x512xf32>
    %173 = vector.shape_cast %172 : vector<1x512xf32> to vector<512xf32>
    %174 = vector.shape_cast %173 : vector<512xf32> to vector<1x1x512xf32>
    %175 = vector.broadcast %174 : vector<1x1x512xf32> to vector<2x2x512xf32>
    %176 = arith.addf %171, %175 : vector<2x2x512xf32>
    %c0_31 = arith.constant 0 : index
    %c0_32 = arith.constant 0 : index
    %c0_33 = arith.constant 0 : index
    %c1024 = arith.constant 1024 : index
    %177 = vector.load %arg7[%c0_31, %c0_32, %c0_33, %c1024] : memref<1x2x2x1536xf32, #tpu.memory_space<vmem>>, vector<1x2x2x512xf32>
    %178 = vector.shape_cast %177 : vector<1x2x2x512xf32> to vector<2x2x512xf32>
    %179 = vector.shape_cast %176 : vector<2x2x512xf32> to vector<1x2x2x512xf32>
    tpu.vector_store %arg7[%c0_31, %c0_32, %c0_33, %c1024], %179 {strides = array<i32>} : memref<1x2x2x1536xf32, #tpu.memory_space<vmem>>, vector<1x2x2x512xf32>,
    return
  }
  func.func @transform_0(%arg0: i32) -> (i32, i32, i32, i32) {
    %c0_i32 = arith.constant 0 : i32
    %c0_i32_0 = arith.constant 0 : i32
    %c0_i32_1 = arith.constant 0 : i32
    %c0_i32_2 = arith.constant 0 : i32
    return %arg0, %c0_i32, %c0_i32_0, %c0_i32_1 : i32, i32, i32, i32
  }
  func.func @transform_1(%arg0: i32) -> (i32, i32, i32) {
    %c0_i32 = arith.constant 0 : i32
    %c0_i32_0 = arith.constant 0 : i32
    %c0_i32_1 = arith.constant 0 : i32
    %c0_i32_2 = arith.constant 0 : i32
    return %c0_i32, %c0_i32_0, %c0_i32_1 : i32, i32, i32
  }
  func.func @transform_2(%arg0: i32) -> (i32, i32, i32) {
    %c0_i32 = arith.constant 0 : i32
    %c0_i32_0 = arith.constant 0 : i32
    %c0_i32_1 = arith.constant 0 : i32
    %c0_i32_2 = arith.constant 0 : i32
    return %c0_i32, %c0_i32_0, %c0_i32_1 : i32, i32, i32
  }
  func.func @transform_3(%arg0: i32) -> (i32, i32, i32) {
    %c0_i32 = arith.constant 0 : i32
    %c0_i32_0 = arith.constant 0 : i32
    %c0_i32_1 = arith.constant 0 : i32
    %c0_i32_2 = arith.constant 0 : i32
    return %c0_i32, %c0_i32_0, %c0_i32_1 : i32, i32, i32
  }
  func.func @transform_4(%arg0: i32) -> (i32, i32) {
    %c0_i32 = arith.constant 0 : i32
    %c0_i32_0 = arith.constant 0 : i32
    %c0_i32_1 = arith.constant 0 : i32
    return %c0_i32, %c0_i32_0 : i32, i32
  }
  func.func @transform_5(%arg0: i32) -> (i32, i32) {
    %c0_i32 = arith.constant 0 : i32
    %c0_i32_0 = arith.constant 0 : i32
    %c0_i32_1 = arith.constant 0 : i32
    return %c0_i32, %c0_i32_0 : i32, i32
  }
  func.func @transform_6(%arg0: i32) -> (i32, i32, i32, i32) {
    %c0_i32 = arith.constant 0 : i32
    %c0_i32_0 = arith.constant 0 : i32
    %c0_i32_1 = arith.constant 0 : i32
    %c0_i32_2 = arith.constant 0 : i32
    return %arg0, %c0_i32, %c0_i32_0, %c0_i32_1 : i32, i32, i32, i32
  }
}

</mosaic_0001>

<llo_original>
// kernel: tpu_custom_call.1
$region0: #{tpu_custom_call.1}
  #allocation0 [shape = 'u32[]', space=smem, size = 0x4, offset = 0x4, fixed_abs, tag = 'smem constant byte address 0x4 - core index']
  #allocation1 [shape = 'u32[144,128]{1,0:T(1,128)}', space=vmem, size = 0x12000, scoped, tag = 'internal scratch']
  %s0 = inlined_call_operand.vmem [shape: f32[2,6,6,512], index: 0, kind: input, shape index: {}]
  %s1 = inlined_call_operand.vmem [shape: f32[3,3,512], index: 1, kind: input, shape index: {}]
  %s2 = inlined_call_operand.vmem [shape: f32[1,5,512], index: 2, kind: input, shape index: {}]
  %s3 = inlined_call_operand.vmem [shape: f32[5,1,512], index: 3, kind: input, shape index: {}]
  %s4 = inlined_call_operand.vmem [shape: f32[3,512], index: 4, kind: input, shape index: {}]
  %s5 = inlined_call_operand.vmem [shape: f32[3,512], index: 5, kind: input, shape index: {}]
  %s6 = inlined_call_operand.hbm [shape: f32[2,2,2,1536], index: 6, kind: output, shape index: {}]
  %s7 = sld [smem:[#allocation0]]
  $region57: #{tpu_custom_call.1} parent=0
    _
  %s9 = ssub.s32 1, %s7
  %s10 = scalar_select 0, %s9, %s7
  $region1: #{tpu_custom_call.1} parent=0
    #allocation2 [shape = 'u8[49152]{0}', space=vmem, size = 0xc000, scoped, tag = 'output window, operand 0']
    #allocation3 [shape = 's32[2]{0}', space=sflag, size = 0x8, scoped, tag = 'scoped memory for tpu_custom_call.1']
    %11 = vsyncpa [#allocation3], 0
    %s12 = scalar_lea.sflag [#allocation3], 1
    %13 = vsyncpa %s12, 0
    loop: start=0, step=1, limit=4
    $region2: #{tpu_custom_call.1} parent=1 // loop_pre_header
      _
    $region3: #{tpu_custom_call.1} parent=1 // loop_header
      %s15 = sphi 0, %s19
      %p16 = scmp.ge.s32.totalorder %s15, 4
      %s25 = sphi 0, %s27
      %s28 = sphi 0, %s25
      %s29 = sphi 0, %s28
      %s45 = sphi 0, %s29
      %s49 = sphi 0, %s49
      %s51 = sphi 0, %s49
      %s52 = sphi 0, %s51
      %s66 = sphi 0, %s52
      %s70 = sphi 0, %s70
      %s72 = sphi 0, %s70
      %s73 = sphi 0, %s72
      %s87 = sphi 0, %s73
      %s91 = sphi 0, %s91
      %s93 = sphi 0, %s91
      %s94 = sphi 0, %s93
      %s108 = sphi 0, %s94
      %s112 = sphi 0, %s112
      %s114 = sphi 0, %s112
      %s115 = sphi 0, %s114
      %s129 = sphi 0, %s115
      %s133 = sphi 0, %s133
      %s135 = sphi 0, %s133
      %s136 = sphi 0, %s135
      %s150 = sphi 0, %s136
      %s156 = sphi 0, %s158
      %s159 = sphi 0, %s156
      %s160 = sphi 0, %s159
      %s176 = sphi 0, %s160
    $region4: #{tpu_custom_call.1} parent=1 // loop_header_branch
      %18 = sbr.rel (%p16) target = $region8
    $region5: #{tpu_custom_call.1} parent=1 // loop_body
      %s20 = ssub.s32 %s15, 1
      %s21 = ssub.s32 %s15, 2
      %s22 = sadd.s32 %s15, 1
      %s23 = ssub.s32 %s15, %s22
      %p24 = scmp.eq.s32.totalorder %s23, 0
      %s26 = sadd.s32 %s25, 1
      %s27 = scalar_select %p24, %s25, %s26
      %p30 = pneg %p24
      %p31 = scmp.eq.s32.totalorder %s15, 1
      %p32 = por %p30, %p31
      %p33 = scmp.ne.s32.totalorder %s25, %s28
      %p34 = scmp.eq.s32.totalorder %s15, 0
      %p35 = por %p33, %p34
      %p36 = scmp.ne.s32.totalorder %s25, %s28
      %p37 = scmp.eq.s32.totalorder %s20, 1
      %p38 = por %p36, %p37
      %p39 = scmp.ne.s32.totalorder %s28, %s29
      %p40 = scmp.eq.s32.totalorder %s20, 0
      %p41 = por %p39, %p40
      %p42 = scmp.ne.s32.totalorder %s28, %s29
      %p43 = scmp.eq.s32.totalorder %s21, 1
      %p44 = por %p42, %p43
      %p46 = scmp.ne.s32.totalorder %s29, %s45
      %p47 = scmp.eq.s32.totalorder %s21, 0
      %p48 = por %p46, %p47
      %s50 = sadd.s32 %s49, 1
      %p53 = scmp.eq.s32.totalorder %s15, 1
      %p54 = scmp.ne.s32.totalorder %s49, %s51
      %p55 = scmp.eq.s32.totalorder %s15, 0
      %p56 = por %p54, %p55
      %p57 = scmp.ne.s32.totalorder %s49, %s51
      %p58 = scmp.eq.s32.totalorder %s20, 1
      %p59 = por %p57, %p58
      %p60 = scmp.ne.s32.totalorder %s51, %s52
      %p61 = scmp.eq.s32.totalorder %s20, 0
      %p62 = por %p60, %p61
      %p63 = scmp.ne.s32.totalorder %s51, %s52
      %p64 = scmp.eq.s32.totalorder %s21, 1
      %p65 = por %p63, %p64
      %p67 = scmp.ne.s32.totalorder %s52, %s66
      %p68 = scmp.eq.s32.totalorder %s21, 0
      %p69 = por %p67, %p68
      %s71 = sadd.s32 %s70, 1
      %p74 = scmp.eq.s32.totalorder %s15, 1
      %p75 = scmp.ne.s32.totalorder %s70, %s72
      %p76 = scmp.eq.s32.totalorder %s15, 0
      %p77 = por %p75, %p76
      %p78 = scmp.ne.s32.totalorder %s70, %s72
      %p79 = scmp.eq.s32.totalorder %s20, 1
      %p80 = por %p78, %p79
      %p81 = scmp.ne.s32.totalorder %s72, %s73
      %p82 = scmp.eq.s32.totalorder %s20, 0
      %p83 = por %p81, %p82
      %p84 = scmp.ne.s32.totalorder %s72, %s73
      %p85 = scmp.eq.s32.totalorder %s21, 1
      %p86 = por %p84, %p85
      %p88 = scmp.ne.s32.totalorder %s73, %s87
      %p89 = scmp.eq.s32.totalorder %s21, 0
      %p90 = por %p88, %p89
      %s92 = sadd.s32 %s91, 1
      %p95 = scmp.eq.s32.totalorder %s15, 1
      %p96 = scmp.ne.s32.totalorder %s91, %s93
      %p97 = scmp.eq.s32.totalorder %s15, 0
      %p98 = por %p96, %p97
      %p99 = scmp.ne.s32.totalorder %s91, %s93
      %p100 = scmp.eq.s32.totalorder %s20, 1
      %p101 = por %p99, %p100
      %p102 = scmp.ne.s32.totalorder %s93, %s94
      %p103 = scmp.eq.s32.totalorder %s20, 0
      %p104 = por %p102, %p103
      %p105 = scmp.ne.s32.totalorder %s93, %s94
      %p106 = scmp.eq.s32.totalorder %s21, 1
      %p107 = por %p105, %p106
      %p109 = scmp.ne.s32.totalorder %s94, %s108
      %p110 = scmp.eq.s32.totalorder %s21, 0
      %p111 = por %p109, %p110
      %s113 = sadd.s32 %s112, 1
      %p116 = scmp.eq.s32.totalorder %s15, 1
      %p117 = scmp.ne.s32.totalorder %s112, %s114
      %p118 = scmp.eq.s32.totalorder %s15, 0
      %p119 = por %p117, %p118
      %p120 = scmp.ne.s32.totalorder %s112, %s114
      %p121 = scmp.eq.s32.totalorder %s20, 1
      %p122 = por %p120, %p121
      %p123 = scmp.ne.s32.totalorder %s114, %s115
      %p124 = scmp.eq.s32.totalorder %s20, 0
      %p125 = por %p123, %p124
      %p126 = scmp.ne.s32.totalorder %s114, %s115
      %p127 = scmp.eq.s32.totalorder %s21, 1
      %p128 = por %p126, %p127
      %p130 = scmp.ne.s32.totalorder %s115, %s129
      %p131 = scmp.eq.s32.totalorder %s21, 0
      %p132 = por %p130, %p131
      %s134 = sadd.s32 %s133, 1
      %p137 = scmp.eq.s32.totalorder %s15, 1
      %p138 = scmp.ne.s32.totalorder %s133, %s135
      %p139 = scmp.eq.s32.totalorder %s15, 0
      %p140 = por %p138, %p139
      %p141 = scmp.ne.s32.totalorder %s133, %s135
      %p142 = scmp.eq.s32.totalorder %s20, 1
      %p143 = por %p141, %p142
      %p144 = scmp.ne.s32.totalorder %s135, %s136
      %p145 = scmp.eq.s32.totalorder %s20, 0
      %p146 = por %p144, %p145
      %p147 = scmp.ne.s32.totalorder %s135, %s136
      %p148 = scmp.eq.s32.totalorder %s21, 1
      %p149 = por %p147, %p148
      %p151 = scmp.ne.s32.totalorder %s136, %s150
      %p152 = scmp.eq.s32.totalorder %s21, 0
      %p153 = por %p151, %p152
      %s154 = ssub.s32 %s15, %s22
      %p155 = scmp.eq.s32.totalorder %s154, 0
      %s157 = sadd.s32 %s156, 1
      %s158 = scalar_select %p155, %s156, %s157
      %p161 = pneg %p155
      %p162 = scmp.eq.s32.totalorder %s15, 1
      %p163 = por %p161, %p162
      %p164 = scmp.ne.s32.totalorder %s156, %s159
      %p165 = scmp.eq.s32.totalorder %s15, 0
      %p166 = por %p164, %p165
      %p167 = scmp.ne.s32.totalorder %s156, %s159
      %p168 = scmp.eq.s32.totalorder %s20, 1
      %p169 = por %p167, %p168
      %p170 = scmp.ne.s32.totalorder %s159, %s160
      %p171 = scmp.eq.s32.totalorder %s20, 0
      %p172 = por %p170, %p171
      %p173 = scmp.ne.s32.totalorder %s159, %s160
      %p174 = scmp.eq.s32.totalorder %s21, 1
      %p175 = por %p173, %p174
      %p177 = scmp.ne.s32.totalorder %s160, %s176
      %p178 = scmp.eq.s32.totalorder %s21, 0
      %p179 = por %p177, %p178
      %p180 = scmp.le.s32.totalorder 1, %s15
      %p181 = scmp.lt.s32.totalorder %s15, 3
      %p182 = pnand %p180, %p181
      %p183 = pneg %p182
      // Predicated region
      $region9: #{tpu_custom_call.1} parent=5 // pred_check
        _
      $region10: #{tpu_custom_call.1} parent=5 // pred_check_branch
        %185 = sbr.rel (%p182) target = $region12
      $region11: #{tpu_custom_call.1} parent=5 // pred_region
        %s186 = ssub.s32 %s15, 1
        // Predicated region
        $region13: #{tpu_custom_call.1} parent=11 // pred_check
          %p187 = pneg %p62
        $region14: #{tpu_custom_call.1} parent=11 // pred_check_branch
          %189 = sbr.rel (%p187) target = $region16
        $region15: #{tpu_custom_call.1} parent=11 // pred_region
          _
        $region16: #{tpu_custom_call.1} parent=11 // pred_fallthru
          _
        // Predicated region
        $region17: #{tpu_custom_call.1} parent=11 // pred_check
          %p190 = pneg %p83
        $region18: #{tpu_custom_call.1} parent=11 // pred_check_branch
          %192 = sbr.rel (%p190) target = $region20
        $region19: #{tpu_custom_call.1} parent=11 // pred_region
          _
        $region20: #{tpu_custom_call.1} parent=11 // pred_fallthru
          _
        // Predicated region
        $region21: #{tpu_custom_call.1} parent=11 // pred_check
          %p193 = pneg %p104
        $region22: #{tpu_custom_call.1} parent=11 // pred_check_branch
          %195 = sbr.rel (%p193) target = $region24
        $region23: #{tpu_custom_call.1} parent=11 // pred_region
          _
        $region24: #{tpu_custom_call.1} parent=11 // pred_fallthru
          _
        // Predicated region
        $region25: #{tpu_custom_call.1} parent=11 // pred_check
          %p196 = pneg %p125
        $region26: #{tpu_custom_call.1} parent=11 // pred_check_branch
          %198 = sbr.rel (%p196) target = $region28
        $region27: #{tpu_custom_call.1} parent=11 // pred_region
          _
        $region28: #{tpu_custom_call.1} parent=11 // pred_fallthru
          _
        // Predicated region
        $region29: #{tpu_custom_call.1} parent=11 // pred_check
          %p199 = pneg %p146
        $region30: #{tpu_custom_call.1} parent=11 // pred_check_branch
          %201 = sbr.rel (%p199) target = $region32
        $region31: #{tpu_custom_call.1} parent=11 // pred_region
          _
        $region32: #{tpu_custom_call.1} parent=11 // pred_fallthru
          _
      $region12: #{tpu_custom_call.1} parent=5 // pred_fallthru
        _
      %p202 = scmp.lt.s32.totalorder %s15, 2
      // Predicated region
      $region33: #{tpu_custom_call.1} parent=5 // pred_check
        %p203 = pneg %p202
      $region34: #{tpu_custom_call.1} parent=5 // pred_check_branch
        %205 = sbr.rel (%p203) target = $region36
      $region35: #{tpu_custom_call.1} parent=5 // pred_region
        // Predicated region
        $region37: #{tpu_custom_call.1} parent=35 // pred_check
          %p206 = pneg %p35
        $region38: #{tpu_custom_call.1} parent=35 // pred_check_branch
          %208 = sbr.rel (%p206) target = $region40
        $region39: #{tpu_custom_call.1} parent=35 // pred_region
          %p209 = scmp.lt.s32.totalorder %s15, 1
          %s210 = scalar_select %p209, %s15, 1
          %s211 = smul.addr %s210, 24
          %s212 = smul.addr %s211, 8
          %s213 = scalar_lea.vmem %s0, %s212
        $region40: #{tpu_custom_call.1} parent=35 // pred_fallthru
          _
      $region36: #{tpu_custom_call.1} parent=5 // pred_fallthru
        _
      %p214 = scmp.le.s32.totalorder 1, %s15
      %p215 = scmp.lt.s32.totalorder %s15, 3
      %p216 = pnand %p214, %p215
      %p217 = pneg %p216
      // Predicated region
      $region41: #{tpu_custom_call.1} parent=5 // pred_check
        _
      $region42: #{tpu_custom_call.1} parent=5 // pred_check_branch
        %219 = sbr.rel (%p216) target = $region44
      $region43: #{tpu_custom_call.1} parent=5 // pred_region
        %s220 = ssub.s32 %s15, 1
        %p221 = scmp.lt.s32.totalorder %s20, 1
        %s222 = scalar_select %p221, %s20, 1
        %s223 = smul.addr %s222, 24
        %s224 = smul.addr %s223, 8
        %s225 = scalar_lea.vmem %s0, %s224
        %p226 = pneg %p41
        %p227 = pneg %p38
        %p228 = pneg %p62
        %p229 = pneg %p59
        %p230 = pneg %p83
        %p231 = pneg %p80
        %p232 = pneg %p104
        %p233 = pneg %p101
        %p234 = pneg %p125
        %p235 = pneg %p122
        %p236 = pneg %p146
        %p237 = pneg %p143
        %p238 = pneg %p172
        %p239 = pneg %p169
        %s240 = sand.u32 %s159, 1
        %s241 = scalar_lea.sflag [#allocation3], %s240
        %s242 = sand.u32 %s159, 1
        %s243 = smul.addr %s242, 48
        %s244 = scalar_lea.vmem [#allocation2], %s243
        %p245 = scmp.lt.s32.totalorder %s20, 1
        %s246 = scalar_select %p245, %s20, 1
        %s247 = smul.addr %s246, 24
        %s248 = smul.addr %s247, 8
        %s249 = scalar_lea.vmem %s0, %s248
        %v250 = vld [vmem:[%s249] sm:$0x3f]
        %v251 = vld [vmem:[%s249 + $0x8] sm:$0x3f]
        %v252 = vld [vmem:[%s249 + $0x10] sm:$0x3f]
        %v253 = vld [vmem:[%s249 + $0x18] sm:$0x3f]
        %v254 = vld [vmem:[%s249 + $0x20] sm:$0x3f]
        %v255 = vld [vmem:[%s249 + $0x28] sm:$0x3f]
        %v256 = vld [vmem:[%s249 + $0x30] sm:$0x3f]
        %v257 = vld [vmem:[%s249 + $0x38] sm:$0x3f]
        %v258 = vld [vmem:[%s249 + $0x40] sm:$0x3f]
        %v259 = vld [vmem:[%s249 + $0x48] sm:$0x3f]
        %v260 = vld [vmem:[%s249 + $0x50] sm:$0x3f]
        %v261 = vld [vmem:[%s249 + $0x58] sm:$0x3f]
        %v262 = vld [vmem:[%s249 + $0x60] sm:$0x3f]
        %v263 = vld [vmem:[%s249 + $0x68] sm:$0x3f]
        %v264 = vld [vmem:[%s249 + $0x70] sm:$0x3f]
        %v265 = vld [vmem:[%s249 + $0x78] sm:$0x3f]
        %v266 = vld [vmem:[%s249 + $0x80] sm:$0x3f]
        %v267 = vld [vmem:[%s249 + $0x88] sm:$0x3f]
        %v268 = vld [vmem:[%s249 + $0x90] sm:$0x3f]
        %v269 = vld [vmem:[%s249 + $0x98] sm:$0x3f]
        %v270 = vld [vmem:[%s249 + $0xa0] sm:$0x3f]
        %v271 = vld [vmem:[%s249 + $0xa8] sm:$0x3f]
        %v272 = vld [vmem:[%s249 + $0xb0] sm:$0x3f]
        %v273 = vld [vmem:[%s249 + $0xb8] sm:$0x3f]
        %v274 = vld [vmem:[%s1] sm:$0x77]
        %v275 = vld [vmem:[%s1 + $0x8] sm:$0x77]
        %v276 = vld [vmem:[%s1 + $0x10] sm:$0x77]
        %v277 = vld [vmem:[%s1 + $0x18] sm:$0x77]
        %v278 = vld [vmem:[%s1 + $0x20] sm:$0x77]
        %v279 = vld [vmem:[%s1 + $0x28] sm:$0x77]
        %v280 = vld [vmem:[%s2] sm:$0x1f]
        %v281 = vld [vmem:[%s2 + $0x8] sm:$0x1f]
        %v282 = vld [vmem:[%s2 + $0x10] sm:$0x1f]
        %v283 = vld [vmem:[%s2 + $0x18] sm:$0x1f]
        %v284 = vld [vmem:[%s3] sm:$0xf]
        %v285 = vld [vmem:[%s3 + $0x4] sm:$0xf]
        %v286 = vld [vmem:[%s3 + $0x8] sm:$0xf]
        %v287 = vld [vmem:[%s3 + $0xc] sm:$0xf]
        %v288 = vld [vmem:[%s3 + $0x10] sm:$0xf]
        %v291 = vlaneseq
        %v292 = vshrl.u32 %v291, 7
        %v293 = vsub.s32 0, %v292
        %v294 = vrot.slane %v274, %v293
        %v295 = vlaneseq
        %v296 = vshrl.u32 %v295, 7
        %v297 = vsub.s32 4, %v296
        %v298 = vrot.slane %v274, %v297
        %v299 = vlaneseq
        %v300 = vshrl.u32 %v299, 7
        %v301 = vsub.s32 0, %v300
        %v302 = vrot.slane %v275, %v301
        %v303 = vlaneseq
        %v304 = vshrl.u32 %v303, 7
        %v305 = vsub.s32 4, %v304
        %v306 = vrot.slane %v275, %v305
        %v311 = vlaneseq
        %v312 = vshrl.u32 %v311, 7
        %v313 = vsub.s32 0, %v312
        %v314 = vrot.slane %v294, %v313
        %v315 = vlaneseq
        %v316 = vshrl.u32 %v315, 7
        %v317 = vsub.s32 0, %v316
        %v318 = vrot.slane %v298, %v317
        %v319 = vlaneseq
        %v320 = vshrl.u32 %v319, 7
        %v321 = vsub.s32 0, %v320
        %v322 = vrot.slane %v302, %v321
        %v323 = vlaneseq
        %v324 = vshrl.u32 %v323, 7
        %v325 = vsub.s32 0, %v324
        %v326 = vrot.slane %v306, %v325
        %v327 = vmul.f32 %v254, %v314
        %v328 = vmul.f32 %v255, %v318
        %v329 = vmul.f32 %v256, %v322
        %v330 = vmul.f32 %v257, %v326
        %v331 = vmul.f32 %v258, %v314
        %v332 = vmul.f32 %v259, %v318
        %v333 = vmul.f32 %v260, %v322
        %v334 = vmul.f32 %v261, %v326
        %v335 = vadd.f32 %v327, 0.0
        %v336 = vadd.f32 %v328, 0.0
        %v337 = vadd.f32 %v329, 0.0
        %v338 = vadd.f32 %v330, 0.0
        %v339 = vadd.f32 %v331, 0.0
        %v340 = vadd.f32 %v332, 0.0
        %v341 = vadd.f32 %v333, 0.0
        %v342 = vadd.f32 %v334, 0.0
        %v343 = vlaneseq
        %v344 = vshrl.u32 %v343, 7
        %v345 = vsub.s32 1, %v344
        %v346 = vrot.slane %v274, %v345
        %v347 = vlaneseq
        %v348 = vshrl.u32 %v347, 7
        %v349 = vsub.s32 5, %v348
        %v350 = vrot.slane %v274, %v349
        %v351 = vlaneseq
        %v352 = vshrl.u32 %v351, 7
        %v353 = vsub.s32 1, %v352
        %v354 = vrot.slane %v275, %v353
        %v355 = vlaneseq
        %v356 = vshrl.u32 %v355, 7
        %v357 = vsub.s32 5, %v356
        %v358 = vrot.slane %v275, %v357
        %v363 = vlaneseq
        %v364 = vshrl.u32 %v363, 7
        %v365 = vsub.s32 1, %v364
        %v366 = vrot.slane %v346, %v365
        %v367 = vlaneseq
        %v368 = vshrl.u32 %v367, 7
        %v369 = vsub.s32 1, %v368
        %v370 = vrot.slane %v350, %v369
        %v371 = vlaneseq
        %v372 = vshrl.u32 %v371, 7
        %v373 = vsub.s32 1, %v372
        %v374 = vrot.slane %v354, %v373
        %v375 = vlaneseq
        %v376 = vshrl.u32 %v375, 7
        %v377 = vsub.s32 1, %v376
        %v378 = vrot.slane %v358, %v377
        %v379 = vmul.f32 %v254, %v366
        %v380 = vmul.f32 %v255, %v370
        %v381 = vmul.f32 %v256, %v374
        %v382 = vmul.f32 %v257, %v378
        %v383 = vmul.f32 %v258, %v366
        %v384 = vmul.f32 %v259, %v370
        %v385 = vmul.f32 %v260, %v374
        %v386 = vmul.f32 %v261, %v378
        %v395 = vrot.slane %v379, 1
        %v396 = vrot.slane %v380, 1
        %v397 = vrot.slane %v381, 1
        %v398 = vrot.slane %v382, 1
        %v399 = vrot.slane %v383, 1
        %v400 = vrot.slane %v384, 1
        %v401 = vrot.slane %v385, 1
        %v402 = vrot.slane %v386, 1
        %v411 = vadd.f32 %v335, %v395
        %v412 = vadd.f32 %v336, %v396
        %v413 = vadd.f32 %v337, %v397
        %v414 = vadd.f32 %v338, %v398
        %v415 = vadd.f32 %v339, %v399
        %v416 = vadd.f32 %v340, %v400
        %v417 = vadd.f32 %v341, %v401
        %v418 = vadd.f32 %v342, %v402
        %v419 = vlaneseq
        %v420 = vshrl.u32 %v419, 7
        %v421 = vsub.s32 2, %v420
        %v422 = vrot.slane %v274, %v421
        %v423 = vlaneseq
        %v424 = vshrl.u32 %v423, 7
        %v425 = vsub.s32 6, %v424
        %v426 = vrot.slane %v274, %v425
        %v427 = vlaneseq
        %v428 = vshrl.u32 %v427, 7
        %v429 = vsub.s32 2, %v428
        %v430 = vrot.slane %v275, %v429
        %v431 = vlaneseq
        %v432 = vshrl.u32 %v431, 7
        %v433 = vsub.s32 6, %v432
        %v434 = vrot.slane %v275, %v433
        %v439 = vlaneseq
        %v440 = vshrl.u32 %v439, 7
        %v441 = vsub.s32 2, %v440
        %v442 = vrot.slane %v422, %v441
        %v443 = vlaneseq
        %v444 = vshrl.u32 %v443, 7
        %v445 = vsub.s32 2, %v444
        %v446 = vrot.slane %v426, %v445
        %v447 = vlaneseq
        %v448 = vshrl.u32 %v447, 7
        %v449 = vsub.s32 2, %v448
        %v450 = vrot.slane %v430, %v449
        %v451 = vlaneseq
        %v452 = vshrl.u32 %v451, 7
        %v453 = vsub.s32 2, %v452
        %v454 = vrot.slane %v434, %v453
        %v455 = vmul.f32 %v254, %v442
        %v456 = vmul.f32 %v255, %v446
        %v457 = vmul.f32 %v256, %v450
        %v458 = vmul.f32 %v257, %v454
        %v459 = vmul.f32 %v258, %v442
        %v460 = vmul.f32 %v259, %v446
        %v461 = vmul.f32 %v260, %v450
        %v462 = vmul.f32 %v261, %v454
        %v471 = vrot.slane %v455, 2
        %v472 = vrot.slane %v456, 2
        %v473 = vrot.slane %v457, 2
        %v474 = vrot.slane %v458, 2
        %v475 = vrot.slane %v459, 2
        %v476 = vrot.slane %v460, 2
        %v477 = vrot.slane %v461, 2
        %v478 = vrot.slane %v462, 2
        %v487 = vadd.f32 %v411, %v471
        %v488 = vadd.f32 %v412, %v472
        %v489 = vadd.f32 %v413, %v473
        %v490 = vadd.f32 %v414, %v474
        %v491 = vadd.f32 %v415, %v475
        %v492 = vadd.f32 %v416, %v476
        %v493 = vadd.f32 %v417, %v477
        %v494 = vadd.f32 %v418, %v478
        %v497 = vlaneseq
        %v498 = vshrl.u32 %v497, 7
        %v499 = vsub.s32 0, %v498
        %v500 = vrot.slane %v276, %v499
        %v501 = vlaneseq
        %v502 = vshrl.u32 %v501, 7
        %v503 = vsub.s32 4, %v502
        %v504 = vrot.slane %v276, %v503
        %v505 = vlaneseq
        %v506 = vshrl.u32 %v505, 7
        %v507 = vsub.s32 0, %v506
        %v508 = vrot.slane %v277, %v507
        %v509 = vlaneseq
        %v510 = vshrl.u32 %v509, 7
        %v511 = vsub.s32 4, %v510
        %v512 = vrot.slane %v277, %v511
        %v517 = vlaneseq
        %v518 = vshrl.u32 %v517, 7
        %v519 = vsub.s32 0, %v518
        %v520 = vrot.slane %v500, %v519
        %v521 = vlaneseq
        %v522 = vshrl.u32 %v521, 7
        %v523 = vsub.s32 0, %v522
        %v524 = vrot.slane %v504, %v523
        %v525 = vlaneseq
        %v526 = vshrl.u32 %v525, 7
        %v527 = vsub.s32 0, %v526
        %v528 = vrot.slane %v508, %v527
        %v529 = vlaneseq
        %v530 = vshrl.u32 %v529, 7
        %v531 = vsub.s32 0, %v530
        %v532 = vrot.slane %v512, %v531
        %v533 = vmul.f32 %v258, %v520
        %v534 = vmul.f32 %v259, %v524
        %v535 = vmul.f32 %v260, %v528
        %v536 = vmul.f32 %v261, %v532
        %v537 = vmul.f32 %v262, %v520
        %v538 = vmul.f32 %v263, %v524
        %v539 = vmul.f32 %v264, %v528
        %v540 = vmul.f32 %v265, %v532
        %v541 = vadd.f32 %v487, %v533
        %v542 = vadd.f32 %v488, %v534
        %v543 = vadd.f32 %v489, %v535
        %v544 = vadd.f32 %v490, %v536
        %v545 = vadd.f32 %v491, %v537
        %v546 = vadd.f32 %v492, %v538
        %v547 = vadd.f32 %v493, %v539
        %v548 = vadd.f32 %v494, %v540
        %v549 = vlaneseq
        %v550 = vshrl.u32 %v549, 7
        %v551 = vsub.s32 1, %v550
        %v552 = vrot.slane %v276, %v551
        %v553 = vlaneseq
        %v554 = vshrl.u32 %v553, 7
        %v555 = vsub.s32 5, %v554
        %v556 = vrot.slane %v276, %v555
        %v557 = vlaneseq
        %v558 = vshrl.u32 %v557, 7
        %v559 = vsub.s32 1, %v558
        %v560 = vrot.slane %v277, %v559
        %v561 = vlaneseq
        %v562 = vshrl.u32 %v561, 7
        %v563 = vsub.s32 5, %v562
        %v564 = vrot.slane %v277, %v563
        %v569 = vlaneseq
        %v570 = vshrl.u32 %v569, 7
        %v571 = vsub.s32 1, %v570
        %v572 = vrot.slane %v552, %v571
        %v573 = vlaneseq
        %v574 = vshrl.u32 %v573, 7
        %v575 = vsub.s32 1, %v574
        %v576 = vrot.slane %v556, %v575
        %v577 = vlaneseq
        %v578 = vshrl.u32 %v577, 7
        %v579 = vsub.s32 1, %v578
        %v580 = vrot.slane %v560, %v579
        %v581 = vlaneseq
        %v582 = vshrl.u32 %v581, 7
        %v583 = vsub.s32 1, %v582
        %v584 = vrot.slane %v564, %v583
        %v585 = vmul.f32 %v258, %v572
        %v586 = vmul.f32 %v259, %v576
        %v587 = vmul.f32 %v260, %v580
        %v588 = vmul.f32 %v261, %v584
        %v589 = vmul.f32 %v262, %v572
        %v590 = vmul.f32 %v263, %v576
        %v591 = vmul.f32 %v264, %v580
        %v592 = vmul.f32 %v265, %v584
        %v601 = vrot.slane %v585, 1
        %v602 = vrot.slane %v586, 1
        %v603 = vrot.slane %v587, 1
        %v604 = vrot.slane %v588, 1
        %v605 = vrot.slane %v589, 1
        %v606 = vrot.slane %v590, 1
        %v607 = vrot.slane %v591, 1
        %v608 = vrot.slane %v592, 1
        %v617 = vadd.f32 %v541, %v601
        %v618 = vadd.f32 %v542, %v602
        %v619 = vadd.f32 %v543, %v603
        %v620 = vadd.f32 %v544, %v604
        %v621 = vadd.f32 %v545, %v605
        %v622 = vadd.f32 %v546, %v606
        %v623 = vadd.f32 %v547, %v607
        %v624 = vadd.f32 %v548, %v608
        %v625 = vlaneseq
        %v626 = vshrl.u32 %v625, 7
        %v627 = vsub.s32 2, %v626
        %v628 = vrot.slane %v276, %v627
        %v629 = vlaneseq
        %v630 = vshrl.u32 %v629, 7
        %v631 = vsub.s32 6, %v630
        %v632 = vrot.slane %v276, %v631
        %v633 = vlaneseq
        %v634 = vshrl.u32 %v633, 7
        %v635 = vsub.s32 2, %v634
        %v636 = vrot.slane %v277, %v635
        %v637 = vlaneseq
        %v638 = vshrl.u32 %v637, 7
        %v639 = vsub.s32 6, %v638
        %v640 = vrot.slane %v277, %v639
        %v645 = vlaneseq
        %v646 = vshrl.u32 %v645, 7
        %v647 = vsub.s32 2, %v646
        %v648 = vrot.slane %v628, %v647
        %v649 = vlaneseq
        %v650 = vshrl.u32 %v649, 7
        %v651 = vsub.s32 2, %v650
        %v652 = vrot.slane %v632, %v651
        %v653 = vlaneseq
        %v654 = vshrl.u32 %v653, 7
        %v655 = vsub.s32 2, %v654
        %v656 = vrot.slane %v636, %v655
        %v657 = vlaneseq
        %v658 = vshrl.u32 %v657, 7
        %v659 = vsub.s32 2, %v658
        %v660 = vrot.slane %v640, %v659
        %v661 = vmul.f32 %v258, %v648
        %v662 = vmul.f32 %v259, %v652
        %v663 = vmul.f32 %v260, %v656
        %v664 = vmul.f32 %v261, %v660
        %v665 = vmul.f32 %v262, %v648
        %v666 = vmul.f32 %v263, %v652
        %v667 = vmul.f32 %v264, %v656
        %v668 = vmul.f32 %v265, %v660
        %v677 = vrot.slane %v661, 2
        %v678 = vrot.slane %v662, 2
        %v679 = vrot.slane %v663, 2
        %v680 = vrot.slane %v664, 2
        %v681 = vrot.slane %v665, 2
        %v682 = vrot.slane %v666, 2
        %v683 = vrot.slane %v667, 2
        %v684 = vrot.slane %v668, 2
        %v693 = vadd.f32 %v617, %v677
        %v694 = vadd.f32 %v618, %v678
        %v695 = vadd.f32 %v619, %v679
        %v696 = vadd.f32 %v620, %v680
        %v697 = vadd.f32 %v621, %v681
        %v698 = vadd.f32 %v622, %v682
        %v699 = vadd.f32 %v623, %v683
        %v700 = vadd.f32 %v624, %v684
        %v703 = vlaneseq
        %v704 = vshrl.u32 %v703, 7
        %v705 = vsub.s32 0, %v704
        %v706 = vrot.slane %v278, %v705
        %v707 = vlaneseq
        %v708 = vshrl.u32 %v707, 7
        %v709 = vsub.s32 4, %v708
        %v710 = vrot.slane %v278, %v709
        %v711 = vlaneseq
        %v712 = vshrl.u32 %v711, 7
        %v713 = vsub.s32 0, %v712
        %v714 = vrot.slane %v279, %v713
        %v715 = vlaneseq
        %v716 = vshrl.u32 %v715, 7
        %v717 = vsub.s32 4, %v716
        %v718 = vrot.slane %v279, %v717
        %v723 = vlaneseq
        %v724 = vshrl.u32 %v723, 7
        %v725 = vsub.s32 0, %v724
        %v726 = vrot.slane %v706, %v725
        %v727 = vlaneseq
        %v728 = vshrl.u32 %v727, 7
        %v729 = vsub.s32 0, %v728
        %v730 = vrot.slane %v710, %v729
        %v731 = vlaneseq
        %v732 = vshrl.u32 %v731, 7
        %v733 = vsub.s32 0, %v732
        %v734 = vrot.slane %v714, %v733
        %v735 = vlaneseq
        %v736 = vshrl.u32 %v735, 7
        %v737 = vsub.s32 0, %v736
        %v738 = vrot.slane %v718, %v737
        %v739 = vmul.f32 %v262, %v726
        %v740 = vmul.f32 %v263, %v730
        %v741 = vmul.f32 %v264, %v734
        %v742 = vmul.f32 %v265, %v738
        %v743 = vmul.f32 %v266, %v726
        %v744 = vmul.f32 %v267, %v730
        %v745 = vmul.f32 %v268, %v734
        %v746 = vmul.f32 %v269, %v738
        %v747 = vadd.f32 %v693, %v739
        %v748 = vadd.f32 %v694, %v740
        %v749 = vadd.f32 %v695, %v741
        %v750 = vadd.f32 %v696, %v742
        %v751 = vadd.f32 %v697, %v743
        %v752 = vadd.f32 %v698, %v744
        %v753 = vadd.f32 %v699, %v745
        %v754 = vadd.f32 %v700, %v746
        %v755 = vlaneseq
        %v756 = vshrl.u32 %v755, 7
        %v757 = vsub.s32 1, %v756
        %v758 = vrot.slane %v278, %v757
        %v759 = vlaneseq
        %v760 = vshrl.u32 %v759, 7
        %v761 = vsub.s32 5, %v760
        %v762 = vrot.slane %v278, %v761
        %v763 = vlaneseq
        %v764 = vshrl.u32 %v763, 7
        %v765 = vsub.s32 1, %v764
        %v766 = vrot.slane %v279, %v765
        %v767 = vlaneseq
        %v768 = vshrl.u32 %v767, 7
        %v769 = vsub.s32 5, %v768
        %v770 = vrot.slane %v279, %v769
        %v775 = vlaneseq
        %v776 = vshrl.u32 %v775, 7
        %v777 = vsub.s32 1, %v776
        %v778 = vrot.slane %v758, %v777
        %v779 = vlaneseq
        %v780 = vshrl.u32 %v779, 7
        %v781 = vsub.s32 1, %v780
        %v782 = vrot.slane %v762, %v781
        %v783 = vlaneseq
        %v784 = vshrl.u32 %v783, 7
        %v785 = vsub.s32 1, %v784
        %v786 = vrot.slane %v766, %v785
        %v787 = vlaneseq
        %v788 = vshrl.u32 %v787, 7
        %v789 = vsub.s32 1, %v788
        %v790 = vrot.slane %v770, %v789
        %v791 = vmul.f32 %v262, %v778
        %v792 = vmul.f32 %v263, %v782
        %v793 = vmul.f32 %v264, %v786
        %v794 = vmul.f32 %v265, %v790
        %v795 = vmul.f32 %v266, %v778
        %v796 = vmul.f32 %v267, %v782
        %v797 = vmul.f32 %v268, %v786
        %v798 = vmul.f32 %v269, %v790
        %v807 = vrot.slane %v791, 1
        %v808 = vrot.slane %v792, 1
        %v809 = vrot.slane %v793, 1
        %v810 = vrot.slane %v794, 1
        %v811 = vrot.slane %v795, 1
        %v812 = vrot.slane %v796, 1
        %v813 = vrot.slane %v797, 1
        %v814 = vrot.slane %v798, 1
        %v823 = vadd.f32 %v747, %v807
        %v824 = vadd.f32 %v748, %v808
        %v825 = vadd.f32 %v749, %v809
        %v826 = vadd.f32 %v750, %v810
        %v827 = vadd.f32 %v751, %v811
        %v828 = vadd.f32 %v752, %v812
        %v829 = vadd.f32 %v753, %v813
        %v830 = vadd.f32 %v754, %v814
        %v831 = vlaneseq
        %v832 = vshrl.u32 %v831, 7
        %v833 = vsub.s32 2, %v832
        %v834 = vrot.slane %v278, %v833
        %v835 = vlaneseq
        %v836 = vshrl.u32 %v835, 7
        %v837 = vsub.s32 6, %v836
        %v838 = vrot.slane %v278, %v837
        %v839 = vlaneseq
        %v840 = vshrl.u32 %v839, 7
        %v841 = vsub.s32 2, %v840
        %v842 = vrot.slane %v279, %v841
        %v843 = vlaneseq
        %v844 = vshrl.u32 %v843, 7
        %v845 = vsub.s32 6, %v844
        %v846 = vrot.slane %v279, %v845
        %v851 = vlaneseq
        %v852 = vshrl.u32 %v851, 7
        %v853 = vsub.s32 2, %v852
        %v854 = vrot.slane %v834, %v853
        %v855 = vlaneseq
        %v856 = vshrl.u32 %v855, 7
        %v857 = vsub.s32 2, %v856
        %v858 = vrot.slane %v838, %v857
        %v859 = vlaneseq
        %v860 = vshrl.u32 %v859, 7
        %v861 = vsub.s32 2, %v860
        %v862 = vrot.slane %v842, %v861
        %v863 = vlaneseq
        %v864 = vshrl.u32 %v863, 7
        %v865 = vsub.s32 2, %v864
        %v866 = vrot.slane %v846, %v865
        %v867 = vmul.f32 %v262, %v854
        %v868 = vmul.f32 %v263, %v858
        %v869 = vmul.f32 %v264, %v862
        %v870 = vmul.f32 %v265, %v866
        %v871 = vmul.f32 %v266, %v854
        %v872 = vmul.f32 %v267, %v858
        %v873 = vmul.f32 %v268, %v862
        %v874 = vmul.f32 %v269, %v866
        %v883 = vrot.slane %v867, 2
        %v884 = vrot.slane %v868, 2
        %v885 = vrot.slane %v869, 2
        %v886 = vrot.slane %v870, 2
        %v887 = vrot.slane %v871, 2
        %v888 = vrot.slane %v872, 2
        %v889 = vrot.slane %v873, 2
        %v890 = vrot.slane %v874, 2
        %v899 = vadd.f32 %v823, %v883
        %v900 = vadd.f32 %v824, %v884
        %v901 = vadd.f32 %v825, %v885
        %v902 = vadd.f32 %v826, %v886
        %v903 = vadd.f32 %v827, %v887
        %v904 = vadd.f32 %v828, %v888
        %v905 = vadd.f32 %v829, %v889
        %v906 = vadd.f32 %v830, %v890
        %v907 = vlaneseq
        %v908 = vshrl.u32 %v907, 7
        %v909 = vsub.s32 0, %v908
        %v910 = vrot.slane %v280, %v909
        %v911 = vlaneseq
        %v912 = vshrl.u32 %v911, 7
        %v913 = vsub.s32 0, %v912
        %v914 = vrot.slane %v281, %v913
        %v915 = vlaneseq
        %v916 = vshrl.u32 %v915, 7
        %v917 = vsub.s32 0, %v916
        %v918 = vrot.slane %v282, %v917
        %v919 = vlaneseq
        %v920 = vshrl.u32 %v919, 7
        %v921 = vsub.s32 0, %v920
        %v922 = vrot.slane %v283, %v921
        %v923 = vmul.f32 %v258, %v910
        %v924 = vmul.f32 %v259, %v914
        %v925 = vmul.f32 %v260, %v918
        %v926 = vmul.f32 %v261, %v922
        %v927 = vmul.f32 %v262, %v910
        %v928 = vmul.f32 %v263, %v914
        %v929 = vmul.f32 %v264, %v918
        %v930 = vmul.f32 %v265, %v922
        %v931 = vadd.f32 %v923, 0.0
        %v932 = vadd.f32 %v924, 0.0
        %v933 = vadd.f32 %v925, 0.0
        %v934 = vadd.f32 %v926, 0.0
        %v935 = vadd.f32 %v927, 0.0
        %v936 = vadd.f32 %v928, 0.0
        %v937 = vadd.f32 %v929, 0.0
        %v938 = vadd.f32 %v930, 0.0
        %v939 = vlaneseq
        %v940 = vshrl.u32 %v939, 7
        %v941 = vsub.s32 1, %v940
        %v942 = vrot.slane %v280, %v941
        %v943 = vlaneseq
        %v944 = vshrl.u32 %v943, 7
        %v945 = vsub.s32 1, %v944
        %v946 = vrot.slane %v281, %v945
        %v947 = vlaneseq
        %v948 = vshrl.u32 %v947, 7
        %v949 = vsub.s32 1, %v948
        %v950 = vrot.slane %v282, %v949
        %v951 = vlaneseq
        %v952 = vshrl.u32 %v951, 7
        %v953 = vsub.s32 1, %v952
        %v954 = vrot.slane %v283, %v953
        %v955 = vmul.f32 %v258, %v942
        %v956 = vmul.f32 %v259, %v946
        %v957 = vmul.f32 %v260, %v950
        %v958 = vmul.f32 %v261, %v954
        %v959 = vmul.f32 %v262, %v942
        %v960 = vmul.f32 %v263, %v946
        %v961 = vmul.f32 %v264, %v950
        %v962 = vmul.f32 %v265, %v954
        %v971 = vrot.slane %v955, 1
        %v972 = vrot.slane %v956, 1
        %v973 = vrot.slane %v957, 1
        %v974 = vrot.slane %v958, 1
        %v975 = vrot.slane %v959, 1
        %v976 = vrot.slane %v960, 1
        %v977 = vrot.slane %v961, 1
        %v978 = vrot.slane %v962, 1
        %v987 = vadd.f32 %v931, %v971
        %v988 = vadd.f32 %v932, %v972
        %v989 = vadd.f32 %v933, %v973
        %v990 = vadd.f32 %v934, %v974
        %v991 = vadd.f32 %v935, %v975
        %v992 = vadd.f32 %v936, %v976
        %v993 = vadd.f32 %v937, %v977
        %v994 = vadd.f32 %v938, %v978
        %v995 = vlaneseq
        %v996 = vshrl.u32 %v995, 7
        %v997 = vsub.s32 2, %v996
        %v998 = vrot.slane %v280, %v997
        %v999 = vlaneseq
        %v1000 = vshrl.u32 %v999, 7
        %v1001 = vsub.s32 2, %v1000
        %v1002 = vrot.slane %v281, %v1001
        %v1003 = vlaneseq
        %v1004 = vshrl.u32 %v1003, 7
        %v1005 = vsub.s32 2, %v1004
        %v1006 = vrot.slane %v282, %v1005
        %v1007 = vlaneseq
        %v1008 = vshrl.u32 %v1007, 7
        %v1009 = vsub.s32 2, %v1008
        %v1010 = vrot.slane %v283, %v1009
        %v1011 = vmul.f32 %v258, %v998
        %v1012 = vmul.f32 %v259, %v1002
        %v1013 = vmul.f32 %v260, %v1006
        %v1014 = vmul.f32 %v261, %v1010
        %v1015 = vmul.f32 %v262, %v998
        %v1016 = vmul.f32 %v263, %v1002
        %v1017 = vmul.f32 %v264, %v1006
        %v1018 = vmul.f32 %v265, %v1010
        %v1027 = vrot.slane %v1011, 2
        %v1028 = vrot.slane %v1012, 2
        %v1029 = vrot.slane %v1013, 2
        %v1030 = vrot.slane %v1014, 2
        %v1031 = vrot.slane %v1015, 2
        %v1032 = vrot.slane %v1016, 2
        %v1033 = vrot.slane %v1017, 2
        %v1034 = vrot.slane %v1018, 2
        %v1043 = vadd.f32 %v987, %v1027
        %v1044 = vadd.f32 %v988, %v1028
        %v1045 = vadd.f32 %v989, %v1029
        %v1046 = vadd.f32 %v990, %v1030
        %v1047 = vadd.f32 %v991, %v1031
        %v1048 = vadd.f32 %v992, %v1032
        %v1049 = vadd.f32 %v993, %v1033
        %v1050 = vadd.f32 %v994, %v1034
        %v1051 = vlaneseq
        %v1052 = vshrl.u32 %v1051, 7
        %v1053 = vsub.s32 3, %v1052
        %v1054 = vrot.slane %v280, %v1053
        %v1055 = vlaneseq
        %v1056 = vshrl.u32 %v1055, 7
        %v1057 = vsub.s32 3, %v1056
        %v1058 = vrot.slane %v281, %v1057
        %v1059 = vlaneseq
        %v1060 = vshrl.u32 %v1059, 7
        %v1061 = vsub.s32 3, %v1060
        %v1062 = vrot.slane %v282, %v1061
        %v1063 = vlaneseq
        %v1064 = vshrl.u32 %v1063, 7
        %v1065 = vsub.s32 3, %v1064
        %v1066 = vrot.slane %v283, %v1065
        %v1067 = vmul.f32 %v258, %v1054
        %v1068 = vmul.f32 %v259, %v1058
        %v1069 = vmul.f32 %v260, %v1062
        %v1070 = vmul.f32 %v261, %v1066
        %v1071 = vmul.f32 %v262, %v1054
        %v1072 = vmul.f32 %v263, %v1058
        %v1073 = vmul.f32 %v264, %v1062
        %v1074 = vmul.f32 %v265, %v1066
        %v1083 = vrot.slane %v1067, 3
        %v1084 = vrot.slane %v1068, 3
        %v1085 = vrot.slane %v1069, 3
        %v1086 = vrot.slane %v1070, 3
        %v1087 = vrot.slane %v1071, 3
        %v1088 = vrot.slane %v1072, 3
        %v1089 = vrot.slane %v1073, 3
        %v1090 = vrot.slane %v1074, 3
        %v1099 = vadd.f32 %v1043, %v1083
        %v1100 = vadd.f32 %v1044, %v1084
        %v1101 = vadd.f32 %v1045, %v1085
        %v1102 = vadd.f32 %v1046, %v1086
        %v1103 = vadd.f32 %v1047, %v1087
        %v1104 = vadd.f32 %v1048, %v1088
        %v1105 = vadd.f32 %v1049, %v1089
        %v1106 = vadd.f32 %v1050, %v1090
        %v1107 = vlaneseq
        %v1108 = vshrl.u32 %v1107, 7
        %v1109 = vsub.s32 4, %v1108
        %v1110 = vrot.slane %v280, %v1109
        %v1111 = vlaneseq
        %v1112 = vshrl.u32 %v1111, 7
        %v1113 = vsub.s32 4, %v1112
        %v1114 = vrot.slane %v281, %v1113
        %v1115 = vlaneseq
        %v1116 = vshrl.u32 %v1115, 7
        %v1117 = vsub.s32 4, %v1116
        %v1118 = vrot.slane %v282, %v1117
        %v1119 = vlaneseq
        %v1120 = vshrl.u32 %v1119, 7
        %v1121 = vsub.s32 4, %v1120
        %v1122 = vrot.slane %v283, %v1121
        %v1123 = vmul.f32 %v258, %v1110
        %v1124 = vmul.f32 %v259, %v1114
        %v1125 = vmul.f32 %v260, %v1118
        %v1126 = vmul.f32 %v261, %v1122
        %v1127 = vmul.f32 %v262, %v1110
        %v1128 = vmul.f32 %v263, %v1114
        %v1129 = vmul.f32 %v264, %v1118
        %v1130 = vmul.f32 %v265, %v1122
        %v1139 = vrot.slane %v1123, 4
        %v1140 = vrot.slane %v1124, 4
        %v1141 = vrot.slane %v1125, 4
        %v1142 = vrot.slane %v1126, 4
        %v1143 = vrot.slane %v1127, 4
        %v1144 = vrot.slane %v1128, 4
        %v1145 = vrot.slane %v1129, 4
        %v1146 = vrot.slane %v1130, 4
        %v1155 = vadd.f32 %v1099, %v1139
        %v1156 = vadd.f32 %v1100, %v1140
        %v1157 = vadd.f32 %v1101, %v1141
        %v1158 = vadd.f32 %v1102, %v1142
        %v1159 = vadd.f32 %v1103, %v1143
        %v1160 = vadd.f32 %v1104, %v1144
        %v1161 = vadd.f32 %v1105, %v1145
        %v1162 = vadd.f32 %v1106, %v1146
        %v1164 = vlaneseq
        %v1165 = vshrl.u32 %v1164, 7
        %v1166 = vsub.s32 0, %v1165
        %v1167 = vrot.slane %v284, %v1166
        %v1168 = vlaneseq
        %v1169 = vshrl.u32 %v1168, 7
        %v1170 = vsub.s32 1, %v1169
        %v1171 = vrot.slane %v284, %v1170
        %v1172 = vlaneseq
        %v1173 = vshrl.u32 %v1172, 7
        %v1174 = vsub.s32 2, %v1173
        %v1175 = vrot.slane %v284, %v1174
        %v1176 = vlaneseq
        %v1177 = vshrl.u32 %v1176, 7
        %v1178 = vsub.s32 3, %v1177
        %v1179 = vrot.slane %v284, %v1178
        %v1184 = vmul.f32 %v250, %v1167
        %v1185 = vmul.f32 %v251, %v1171
        %v1186 = vmul.f32 %v252, %v1175
        %v1187 = vmul.f32 %v253, %v1179
        %v1188 = vmul.f32 %v254, %v1167
        %v1189 = vmul.f32 %v255, %v1171
        %v1190 = vmul.f32 %v256, %v1175
        %v1191 = vmul.f32 %v257, %v1179
        %v1192 = vadd.f32 %v1184, 0.0
        %v1193 = vadd.f32 %v1185, 0.0
        %v1194 = vadd.f32 %v1186, 0.0
        %v1195 = vadd.f32 %v1187, 0.0
        %v1196 = vadd.f32 %v1188, 0.0
        %v1197 = vadd.f32 %v1189, 0.0
        %v1198 = vadd.f32 %v1190, 0.0
        %v1199 = vadd.f32 %v1191, 0.0
        %v1201 = vlaneseq
        %v1202 = vshrl.u32 %v1201, 7
        %v1203 = vsub.s32 0, %v1202
        %v1204 = vrot.slane %v285, %v1203
        %v1205 = vlaneseq
        %v1206 = vshrl.u32 %v1205, 7
        %v1207 = vsub.s32 1, %v1206
        %v1208 = vrot.slane %v285, %v1207
        %v1209 = vlaneseq
        %v1210 = vshrl.u32 %v1209, 7
        %v1211 = vsub.s32 2, %v1210
        %v1212 = vrot.slane %v285, %v1211
        %v1213 = vlaneseq
        %v1214 = vshrl.u32 %v1213, 7
        %v1215 = vsub.s32 3, %v1214
        %v1216 = vrot.slane %v285, %v1215
        %v1221 = vmul.f32 %v254, %v1204
        %v1222 = vmul.f32 %v255, %v1208
        %v1223 = vmul.f32 %v256, %v1212
        %v1224 = vmul.f32 %v257, %v1216
        %v1225 = vmul.f32 %v258, %v1204
        %v1226 = vmul.f32 %v259, %v1208
        %v1227 = vmul.f32 %v260, %v1212
        %v1228 = vmul.f32 %v261, %v1216
        %v1229 = vadd.f32 %v1192, %v1221
        %v1230 = vadd.f32 %v1193, %v1222
        %v1231 = vadd.f32 %v1194, %v1223
        %v1232 = vadd.f32 %v1195, %v1224
        %v1233 = vadd.f32 %v1196, %v1225
        %v1234 = vadd.f32 %v1197, %v1226
        %v1235 = vadd.f32 %v1198, %v1227
        %v1236 = vadd.f32 %v1199, %v1228
        %v1238 = vlaneseq
        %v1239 = vshrl.u32 %v1238, 7
        %v1240 = vsub.s32 0, %v1239
        %v1241 = vrot.slane %v286, %v1240
        %v1242 = vlaneseq
        %v1243 = vshrl.u32 %v1242, 7
        %v1244 = vsub.s32 1, %v1243
        %v1245 = vrot.slane %v286, %v1244
        %v1246 = vlaneseq
        %v1247 = vshrl.u32 %v1246, 7
        %v1248 = vsub.s32 2, %v1247
        %v1249 = vrot.slane %v286, %v1248
        %v1250 = vlaneseq
        %v1251 = vshrl.u32 %v1250, 7
        %v1252 = vsub.s32 3, %v1251
        %v1253 = vrot.slane %v286, %v1252
        %v1258 = vmul.f32 %v258, %v1241
        %v1259 = vmul.f32 %v259, %v1245
        %v1260 = vmul.f32 %v260, %v1249
        %v1261 = vmul.f32 %v261, %v1253
        %v1262 = vmul.f32 %v262, %v1241
        %v1263 = vmul.f32 %v263, %v1245
        %v1264 = vmul.f32 %v264, %v1249
        %v1265 = vmul.f32 %v265, %v1253
        %v1266 = vadd.f32 %v1229, %v1258
        %v1267 = vadd.f32 %v1230, %v1259
        %v1268 = vadd.f32 %v1231, %v1260
        %v1269 = vadd.f32 %v1232, %v1261
        %v1270 = vadd.f32 %v1233, %v1262
        %v1271 = vadd.f32 %v1234, %v1263
        %v1272 = vadd.f32 %v1235, %v1264
        %v1273 = vadd.f32 %v1236, %v1265
        %v1275 = vlaneseq
        %v1276 = vshrl.u32 %v1275, 7
        %v1277 = vsub.s32 0, %v1276
        %v1278 = vrot.slane %v287, %v1277
        %v1279 = vlaneseq
        %v1280 = vshrl.u32 %v1279, 7
        %v1281 = vsub.s32 1, %v1280
        %v1282 = vrot.slane %v287, %v1281
        %v1283 = vlaneseq
        %v1284 = vshrl.u32 %v1283, 7
        %v1285 = vsub.s32 2, %v1284
        %v1286 = vrot.slane %v287, %v1285
        %v1287 = vlaneseq
        %v1288 = vshrl.u32 %v1287, 7
        %v1289 = vsub.s32 3, %v1288
        %v1290 = vrot.slane %v287, %v1289
        %v1295 = vmul.f32 %v262, %v1278
        %v1296 = vmul.f32 %v263, %v1282
        %v1297 = vmul.f32 %v264, %v1286
        %v1298 = vmul.f32 %v265, %v1290
        %v1299 = vmul.f32 %v266, %v1278
        %v1300 = vmul.f32 %v267, %v1282
        %v1301 = vmul.f32 %v268, %v1286
        %v1302 = vmul.f32 %v269, %v1290
        %v1303 = vadd.f32 %v1266, %v1295
        %v1304 = vadd.f32 %v1267, %v1296
        %v1305 = vadd.f32 %v1268, %v1297
        %v1306 = vadd.f32 %v1269, %v1298
        %v1307 = vadd.f32 %v1270, %v1299
        %v1308 = vadd.f32 %v1271, %v1300
        %v1309 = vadd.f32 %v1272, %v1301
        %v1310 = vadd.f32 %v1273, %v1302
        %v1312 = vlaneseq
        %v1313 = vshrl.u32 %v1312, 7
        %v1314 = vsub.s32 0, %v1313
        %v1315 = vrot.slane %v288, %v1314
        %v1316 = vlaneseq
        %v1317 = vshrl.u32 %v1316, 7
        %v1318 = vsub.s32 1, %v1317
        %v1319 = vrot.slane %v288, %v1318
        %v1320 = vlaneseq
        %v1321 = vshrl.u32 %v1320, 7
        %v1322 = vsub.s32 2, %v1321
        %v1323 = vrot.slane %v288, %v1322
        %v1324 = vlaneseq
        %v1325 = vshrl.u32 %v1324, 7
        %v1326 = vsub.s32 3, %v1325
        %v1327 = vrot.slane %v288, %v1326
        %v1332 = vmul.f32 %v266, %v1315
        %v1333 = vmul.f32 %v267, %v1319
        %v1334 = vmul.f32 %v268, %v1323
        %v1335 = vmul.f32 %v269, %v1327
        %v1336 = vmul.f32 %v270, %v1315
        %v1337 = vmul.f32 %v271, %v1319
        %v1338 = vmul.f32 %v272, %v1323
        %v1339 = vmul.f32 %v273, %v1327
        %v1340 = vadd.f32 %v1303, %v1332
        %v1341 = vadd.f32 %v1304, %v1333
        %v1342 = vadd.f32 %v1305, %v1334
        %v1343 = vadd.f32 %v1306, %v1335
        %v1344 = vadd.f32 %v1307, %v1336
        %v1345 = vadd.f32 %v1308, %v1337
        %v1346 = vadd.f32 %v1309, %v1338
        %v1347 = vadd.f32 %v1310, %v1339
        %v1348 = vld [vmem:[%s4] ss:$4 sm:$0xf]
        %v1350 = vlaneseq
        %v1351 = vshrl.u32 %v1350, 7
        %v1352 = vsub.s32 0, %v1351
        %v1353 = vrot.slane %v1348, %v1352
        %v1354 = vlaneseq
        %v1355 = vshrl.u32 %v1354, 7
        %v1356 = vsub.s32 1, %v1355
        %v1357 = vrot.slane %v1348, %v1356
        %v1358 = vlaneseq
        %v1359 = vshrl.u32 %v1358, 7
        %v1360 = vsub.s32 2, %v1359
        %v1361 = vrot.slane %v1348, %v1360
        %v1362 = vlaneseq
        %v1363 = vshrl.u32 %v1362, 7
        %v1364 = vsub.s32 3, %v1363
        %v1365 = vrot.slane %v1348, %v1364
        %v1370 = vmul.f32 %v899, %v1353
        %v1371 = vmul.f32 %v900, %v1357
        %v1372 = vmul.f32 %v901, %v1361
        %v1373 = vmul.f32 %v902, %v1365
        %v1374 = vmul.f32 %v903, %v1353
        %v1375 = vmul.f32 %v904, %v1357
        %v1376 = vmul.f32 %v905, %v1361
        %v1377 = vmul.f32 %v906, %v1365
        %v1378 = vld [vmem:[%s5] ss:$4 sm:$0xf]
        %v1380 = vlaneseq
        %v1381 = vshrl.u32 %v1380, 7
        %v1382 = vsub.s32 0, %v1381
        %v1383 = vrot.slane %v1378, %v1382
        %v1384 = vlaneseq
        %v1385 = vshrl.u32 %v1384, 7
        %v1386 = vsub.s32 1, %v1385
        %v1387 = vrot.slane %v1378, %v1386
        %v1388 = vlaneseq
        %v1389 = vshrl.u32 %v1388, 7
        %v1390 = vsub.s32 2, %v1389
        %v1391 = vrot.slane %v1378, %v1390
        %v1392 = vlaneseq
        %v1393 = vshrl.u32 %v1392, 7
        %v1394 = vsub.s32 3, %v1393
        %v1395 = vrot.slane %v1378, %v1394
        %v1400 = vadd.f32 %v1370, %v1383
        %v1401 = vadd.f32 %v1371, %v1387
        %v1402 = vadd.f32 %v1372, %v1391
        %v1403 = vadd.f32 %v1373, %v1395
        %v1404 = vadd.f32 %v1374, %v1383
        %v1405 = vadd.f32 %v1375, %v1387
        %v1406 = vadd.f32 %v1376, %v1391
        %v1407 = vadd.f32 %v1377, %v1395
        %v1416 = vcombine.low %v1400, %v1401
        %v1417 = vcombine.low %v1402, %v1403
        %v1419 = vunpack.c.l.s4 1983009808
        %v1420 = vunpack.c.0.s8 %v1419
        %v1421 = vlaneseq
        %v1422 = vshrl.u32 %v1421, 7
        %v1423 = vsub.s32 %v1420, %v1422
        %v1424 = vrot.slane %v1416, %v1423
        %v1426 = vunpack.c.l.s4 1983009808
        %v1427 = vunpack.c.0.s8 %v1426
        %v1428 = vlaneseq
        %v1429 = vshrl.u32 %v1428, 7
        %v1430 = vsub.s32 %v1427, %v1429
        %v1431 = vrot.slane %v1417, %v1430
        %v1432 = vcombine.low %v1424, %v1431
        %v1433 = vcombine.high %v1424, %v1431
        %v1434 = vcombine.low %v1404, %v1405
        %v1435 = vcombine.low %v1406, %v1407
        %v1437 = vunpack.c.l.s4 1983009808
        %v1438 = vunpack.c.0.s8 %v1437
        %v1439 = vlaneseq
        %v1440 = vshrl.u32 %v1439, 7
        %v1441 = vsub.s32 %v1438, %v1440
        %v1442 = vrot.slane %v1434, %v1441
        %v1444 = vunpack.c.l.s4 1983009808
        %v1445 = vunpack.c.0.s8 %v1444
        %v1446 = vlaneseq
        %v1447 = vshrl.u32 %v1446, 7
        %v1448 = vsub.s32 %v1445, %v1447
        %v1449 = vrot.slane %v1435, %v1448
        %v1450 = vcombine.low %v1442, %v1449
        %v1451 = vcombine.high %v1442, %v1449
        %vm1452 = vcmask 1040384
        %vm1453 = vcmask 1042434
        %vm1454 = vmor %vm1452, %vm1453
        %vm1455 = vcmask 1044484
        %vm1456 = vmor %vm1454, %vm1455
        %vm1457 = vcmask 1046534
        %vm1458 = vmor %vm1456, %vm1457
        %v1459 = vrot.slane %v1432, 7
        %v1460 = vrot.slane %v1459, 2
        %v1461 = vrot.slane %v1433, 7
        %v1462 = vsel %vm1458, %v1460, %v1461
        %v1463 = vrot.slane %v1450, 7
        %v1464 = vrot.slane %v1463, 2
        %v1465 = vrot.slane %v1451, 7
        %v1466 = vsel %vm1458, %v1464, %v1465
        %1469 = vst [vmem:[%s244] sm:$0xff] %v1462
        %1470 = vst [vmem:[%s244 + $0x18] sm:$0xff] %v1466
        %s1471 = scalar_lea.vmem %s4, 1
        %v1472 = vld [vmem:[%s1471] ss:$4 sm:$0xf]
        %v1474 = vlaneseq
        %v1475 = vshrl.u32 %v1474, 7
        %v1476 = vsub.s32 0, %v1475
        %v1477 = vrot.slane %v1472, %v1476
        %v1478 = vlaneseq
        %v1479 = vshrl.u32 %v1478, 7
        %v1480 = vsub.s32 1, %v1479
        %v1481 = vrot.slane %v1472, %v1480
        %v1482 = vlaneseq
        %v1483 = vshrl.u32 %v1482, 7
        %v1484 = vsub.s32 2, %v1483
        %v1485 = vrot.slane %v1472, %v1484
        %v1486 = vlaneseq
        %v1487 = vshrl.u32 %v1486, 7
        %v1488 = vsub.s32 3, %v1487
        %v1489 = vrot.slane %v1472, %v1488
        %v1494 = vmul.f32 %v1155, %v1477
        %v1495 = vmul.f32 %v1156, %v1481
        %v1496 = vmul.f32 %v1157, %v1485
        %v1497 = vmul.f32 %v1158, %v1489
        %v1498 = vmul.f32 %v1159, %v1477
        %v1499 = vmul.f32 %v1160, %v1481
        %v1500 = vmul.f32 %v1161, %v1485
        %v1501 = vmul.f32 %v1162, %v1489
        %s1502 = scalar_lea.vmem %s5, 1
        %v1503 = vld [vmem:[%s1502] ss:$4 sm:$0xf]
        %v1505 = vlaneseq
        %v1506 = vshrl.u32 %v1505, 7
        %v1507 = vsub.s32 0, %v1506
        %v1508 = vrot.slane %v1503, %v1507
        %v1509 = vlaneseq
        %v1510 = vshrl.u32 %v1509, 7
        %v1511 = vsub.s32 1, %v1510
        %v1512 = vrot.slane %v1503, %v1511
        %v1513 = vlaneseq
        %v1514 = vshrl.u32 %v1513, 7
        %v1515 = vsub.s32 2, %v1514
        %v1516 = vrot.slane %v1503, %v1515
        %v1517 = vlaneseq
        %v1518 = vshrl.u32 %v1517, 7
        %v1519 = vsub.s32 3, %v1518
        %v1520 = vrot.slane %v1503, %v1519
        %v1525 = vadd.f32 %v1494, %v1508
        %v1526 = vadd.f32 %v1495, %v1512
        %v1527 = vadd.f32 %v1496, %v1516
        %v1528 = vadd.f32 %v1497, %v1520
        %v1529 = vadd.f32 %v1498, %v1508
        %v1530 = vadd.f32 %v1499, %v1512
        %v1531 = vadd.f32 %v1500, %v1516
        %v1532 = vadd.f32 %v1501, %v1520
        %v1541 = vcombine.low %v1525, %v1526
        %v1542 = vcombine.low %v1527, %v1528
        %v1544 = vunpack.c.l.s4 1983009808
        %v1545 = vunpack.c.0.s8 %v1544
        %v1546 = vlaneseq
        %v1547 = vshrl.u32 %v1546, 7
        %v1548 = vsub.s32 %v1545, %v1547
        %v1549 = vrot.slane %v1541, %v1548
        %v1551 = vunpack.c.l.s4 1983009808
        %v1552 = vunpack.c.0.s8 %v1551
        %v1553 = vlaneseq
        %v1554 = vshrl.u32 %v1553, 7
        %v1555 = vsub.s32 %v1552, %v1554
        %v1556 = vrot.slane %v1542, %v1555
        %v1557 = vcombine.low %v1549, %v1556
        %v1558 = vcombine.low %v1529, %v1530
        %v1559 = vcombine.low %v1531, %v1532
        %v1561 = vunpack.c.l.s4 1983009808
        %v1562 = vunpack.c.0.s8 %v1561
        %v1563 = vlaneseq
        %v1564 = vshrl.u32 %v1563, 7
        %v1565 = vsub.s32 %v1562, %v1564
        %v1566 = vrot.slane %v1558, %v1565
        %v1568 = vunpack.c.l.s4 1983009808
        %v1569 = vunpack.c.0.s8 %v1568
        %v1570 = vlaneseq
        %v1571 = vshrl.u32 %v1570, 7
        %v1572 = vsub.s32 %v1569, %v1571
        %v1573 = vrot.slane %v1559, %v1572
        %v1574 = vcombine.low %v1566, %v1573
        %1577 = vst [vmem:[%s244 + $0x8] sm:$0xff] %v1557
        %1578 = vst [vmem:[%s244 + $0x20] sm:$0xff] %v1574
        %s1579 = scalar_lea.vmem %s4, 2
        %v1580 = vld [vmem:[%s1579] ss:$4 sm:$0xf]
        %v1582 = vlaneseq
        %v1583 = vshrl.u32 %v1582, 7
        %v1584 = vsub.s32 0, %v1583
        %v1585 = vrot.slane %v1580, %v1584
        %v1586 = vlaneseq
        %v1587 = vshrl.u32 %v1586, 7
        %v1588 = vsub.s32 1, %v1587
        %v1589 = vrot.slane %v1580, %v1588
        %v1590 = vlaneseq
        %v1591 = vshrl.u32 %v1590, 7
        %v1592 = vsub.s32 2, %v1591
        %v1593 = vrot.slane %v1580, %v1592
        %v1594 = vlaneseq
        %v1595 = vshrl.u32 %v1594, 7
        %v1596 = vsub.s32 3, %v1595
        %v1597 = vrot.slane %v1580, %v1596
        %v1602 = vmul.f32 %v1340, %v1585
        %v1603 = vmul.f32 %v1341, %v1589
        %v1604 = vmul.f32 %v1342, %v1593
        %v1605 = vmul.f32 %v1343, %v1597
        %v1606 = vmul.f32 %v1344, %v1585
        %v1607 = vmul.f32 %v1345, %v1589
        %v1608 = vmul.f32 %v1346, %v1593
        %v1609 = vmul.f32 %v1347, %v1597
        %s1610 = scalar_lea.vmem %s5, 2
        %v1611 = vld [vmem:[%s1610] ss:$4 sm:$0xf]
        %v1613 = vlaneseq
        %v1614 = vshrl.u32 %v1613, 7
        %v1615 = vsub.s32 0, %v1614
        %v1616 = vrot.slane %v1611, %v1615
        %v1617 = vlaneseq
        %v1618 = vshrl.u32 %v1617, 7
        %v1619 = vsub.s32 1, %v1618
        %v1620 = vrot.slane %v1611, %v1619
        %v1621 = vlaneseq
        %v1622 = vshrl.u32 %v1621, 7
        %v1623 = vsub.s32 2, %v1622
        %v1624 = vrot.slane %v1611, %v1623
        %v1625 = vlaneseq
        %v1626 = vshrl.u32 %v1625, 7
        %v1627 = vsub.s32 3, %v1626
        %v1628 = vrot.slane %v1611, %v1627
        %v1633 = vadd.f32 %v1602, %v1616
        %v1634 = vadd.f32 %v1603, %v1620
        %v1635 = vadd.f32 %v1604, %v1624
        %v1636 = vadd.f32 %v1605, %v1628
        %v1637 = vadd.f32 %v1606, %v1616
        %v1638 = vadd.f32 %v1607, %v1620
        %v1639 = vadd.f32 %v1608, %v1624
        %v1640 = vadd.f32 %v1609, %v1628
        %v1649 = vcombine.low %v1633, %v1634
        %v1650 = vcombine.low %v1635, %v1636
        %v1652 = vunpack.c.l.s4 1983009808
        %v1653 = vunpack.c.0.s8 %v1652
        %v1654 = vlaneseq
        %v1655 = vshrl.u32 %v1654, 7
        %v1656 = vsub.s32 %v1653, %v1655
        %v1657 = vrot.slane %v1649, %v1656
        %v1659 = vunpack.c.l.s4 1983009808
        %v1660 = vunpack.c.0.s8 %v1659
        %v1661 = vlaneseq
        %v1662 = vshrl.u32 %v1661, 7
        %v1663 = vsub.s32 %v1660, %v1662
        %v1664 = vrot.slane %v1650, %v1663
        %v1665 = vcombine.high %v1657, %v1664
        %v1666 = vcombine.low %v1637, %v1638
        %v1667 = vcombine.low %v1639, %v1640
        %v1669 = vunpack.c.l.s4 1983009808
        %v1670 = vunpack.c.0.s8 %v1669
        %v1671 = vlaneseq
        %v1672 = vshrl.u32 %v1671, 7
        %v1673 = vsub.s32 %v1670, %v1672
        %v1674 = vrot.slane %v1666, %v1673
        %v1676 = vunpack.c.l.s4 1983009808
        %v1677 = vunpack.c.0.s8 %v1676
        %v1678 = vlaneseq
        %v1679 = vshrl.u32 %v1678, 7
        %v1680 = vsub.s32 %v1677, %v1679
        %v1681 = vrot.slane %v1667, %v1680
        %v1682 = vcombine.high %v1674, %v1681
        %1685 = vst [vmem:[%s244 + $0x10] sm:$0xff] %v1665
        %1686 = vst [vmem:[%s244 + $0x28] sm:$0xff] %v1682
        %s1687 = sand.u32 %s159, 1
        %s1688 = scalar_lea.sflag [#allocation3], %s1687
        %s1689 = sand.u32 %s159, 1
        %s1690 = smul.addr %s1689, 48
        %s1691 = scalar_lea.vmem [#allocation2], %s1690
        // Predicated region
        $region45: #{tpu_custom_call.1} parent=43 // pred_check
          %p1692 = pneg %p169
        $region46: #{tpu_custom_call.1} parent=43 // pred_check_branch
          %1694 = sbr.rel (%p1692) target = $region48
        $region47: #{tpu_custom_call.1} parent=43 // pred_region
          %s1696 = ssub.s32 768, 768
          %1697 = vsyncadd %s1688, %s1696
          %s1698 = smul.addr %s20, 24
          %s1699 = smul.addr %s1698, 32
          %s1700 = scalar_lea.hbm %s6, %s1699
          %s1701 = sshll.u32 %s1691, 4
          %s1702 = int_to_ptr.vmem [resolvable:$true] %s1701
          %1707 = dma.vmem_to_hbm [thread:$0]  %s1702, 768, %s1700, %s1688, 384, 384, 24
        $region48: #{tpu_custom_call.1} parent=43 // pred_fallthru
          _
      $region44: #{tpu_custom_call.1} parent=5 // pred_fallthru
        _
      %p1708 = scmp.le.s32.totalorder 2, %s15
      // Predicated region
      $region49: #{tpu_custom_call.1} parent=5 // pred_check
        %p1709 = pneg %p1708
      $region50: #{tpu_custom_call.1} parent=5 // pred_check_branch
        %1711 = sbr.rel (%p1709) target = $region52
      $region51: #{tpu_custom_call.1} parent=5 // pred_region
        %s1712 = ssub.s32 %s15, 2
        // Predicated region
        $region53: #{tpu_custom_call.1} parent=51 // pred_check
          %p1713 = pneg %p175
        $region54: #{tpu_custom_call.1} parent=51 // pred_check_branch
          %1715 = sbr.rel (%p1713) target = $region56
        $region55: #{tpu_custom_call.1} parent=51 // pred_region
          %s1716 = sand.u32 %s160, 1
          %s1717 = scalar_lea.sflag [#allocation3], %s1716
          %s1718 = sand.u32 %s160, 1
          %s1719 = smul.addr %s1718, 48
          %s1720 = scalar_lea.vmem [#allocation2], %s1719
          %1721 = dma.done %s1717, 768
        $region56: #{tpu_custom_call.1} parent=51 // pred_fallthru
          _
      $region52: #{tpu_custom_call.1} parent=5 // pred_fallthru
        _
    $region6: #{tpu_custom_call.1} parent=1 // loop_footer
      %s19 = sadd.s32 1, %s15
    $region7: #{tpu_custom_call.1} parent=1 // loop_footer_branch
      %14 = sbr.rel target = $region3
    $region8: #{tpu_custom_call.1} parent=1 // loop_exit
      _
    %1722 = vsyncpa [#allocation3], 1
    %s1723 = scalar_lea.sflag [#allocation3], 1
    %1724 = vsyncpa %s1723, 1

</llo_original>
